<compile_context>
chip_gen: v5e
topology: v5e:2x2
jax: 0.10.0
libtpu: 0.0.40
codegen_flags: <defaults>
</compile_context>

<pallas_src>
import functools

import jax
import jax.numpy as jnp
from jax.experimental import pallas as pl
from jax.experimental.pallas import tpu as pltpu

_MIB = 2 ** 20


def _round_up(x, m):
    return (x + m - 1) // m * m


def _tpu_vmem_capacity_bytes():
    try:
        return int(pltpu.get_tpu_info().vmem_capacity_bytes)
    except Exception:
        return 128 * _MIB


def _tpu_device_kind():
    try:
        return jax.devices()[0].device_kind.lower()
    except Exception:
        return ""


def lora_linear_kernel(x_ref, w_org_ref, b_ref, w_down_ref, w_up_ref, o_ref,
                       lx_ref, *, lora_scale, precision):
    # Hoisted rank-r down-projection: computed once per row tile (out-tile
    # index 0) and reused for every out tile of that row tile.  The static
    # LoRA scale is folded in here (tile_m x lora_pad elements, num_n x fewer
    # than scaling the output tile every step).
    @pl.when(pl.program_id(1) == 0)
    def _():
        lx = jnp.dot(x_ref[...], w_down_ref[...],
                     preferred_element_type=jnp.float32, precision=precision)
        lx_ref[...] = (lx * lora_scale).astype(lx_ref.dtype)

    # Single f32 accumulator shared by both matmuls (in-place MRB accumulate
    # on v7x; avoids a second f32 tile_m x tile_n intermediate elsewhere).
    acc = jnp.dot(x_ref[...], w_org_ref[...],
                  preferred_element_type=jnp.float32, precision=precision)
    acc += jnp.dot(lx_ref[...], w_up_ref[...],
                   preferred_element_type=jnp.float32, precision=precision)
    o_ref[...] = (acc + b_ref[...]).astype(o_ref.dtype)


def lora_linear(x, w_org, b_org, w_down, w_up, *, multiplier, alpha, lora_dim,
                tile_m=None, tile_n=None, compute_dtype=jnp.bfloat16):
    """Fused LoRA linear forward.

    x: [..., in_dim]; w_org: [out_dim, in_dim]; b_org: [out_dim] or None;
    w_down: [lora_dim, in_dim]; w_up: [out_dim, lora_dim].
    """
    orig_shape = x.shape
    in_dim = orig_shape[-1]
    out_dim = w_org.shape[0]
    out_dtype = x.dtype

    x2 = x.reshape(-1, in_dim)
    N = x2.shape[0]

    if b_org is None:
        b_org = jnp.zeros((out_dim,), jnp.float32)

    scale = float(alpha) / float(lora_dim)           # self.scale in the module
    lora_scale = float(multiplier) * scale           # static, baked into kernel

    cbytes = jnp.dtype(compute_dtype).itemsize
    obytes = jnp.dtype(out_dtype).itemsize
    lora_pad = _round_up(lora_dim, 128)              # full-lane LoRA matmuls

    # --- generation-aware tile sizing / VMEM budget -------------------------
    vmem_cap = _tpu_vmem_capacity_bytes()
    kind = _tpu_device_kind()
    small_vmem = vmem_cap <= 64 * _MIB               # v7x-class TensorCore
    if small_vmem:
        budget = min(52 * _MIB, vmem_cap - 8 * _MIB)   # leave Mosaic headroom
    else:
        budget = min(96 * _MIB, vmem_cap - 32 * _MIB)  # v5e/v6e (128 MiB VMEM)
    budget = max(budget, 24 * _MIB)

    if tile_n is None:
        # Bigger out tiles halve per-step overhead on v6e; 256 elsewhere.
        tile_n = 512 if ("v6" in kind and not small_vmem and out_dim >= 2048) else 256
    if tile_m is None:
        # v6e is HBM-bound at tile_m=512 when W_org^T is re-streamed per row
        # tile (ridge ~660 flop/byte); 1024 crosses it.  v5e/v7x are already
        # compute-bound at 512.
        tile_m = 1024 if ("v6" in kind and not small_vmem) else 512

    tile_m = _round_up(min(tile_m, _round_up(N, 16)), 16)
    tile_n = _round_up(min(tile_n, _round_up(out_dim, 128)), 128)

    # v7x megacore: ensure the "parallel" row axis spans both TensorCores.
    if small_vmem and _round_up(N, tile_m) // tile_m < 2 and N > 16:
        tile_m = _round_up(pl.cdiv(N, 2), 16)

    def _footprint(tm, tn):
        return (2 * (tm * in_dim * cbytes           # x tile (double buffered)
                     + in_dim * tn * cbytes         # W_org^T tile
                     + tn * 4                       # bias tile (f32)
                     + lora_pad * tn * cbytes       # W_up^T tile
                     + tm * tn * obytes)            # out tile
                + in_dim * lora_pad * cbytes        # W_down^T (single buffered)
                + tm * lora_pad * cbytes            # lx scratch
                + tm * tn * 4                       # f32 matmul accumulator
                + 2 * _MIB)                         # DMA / internal headroom

    # Graceful re-tile instead of silently clamping below the real footprint.
    while _footprint(tile_m, tile_n) > budget and tile_m > 64:
        tile_m = _round_up(tile_m // 2, 16)
    while _footprint(tile_m, tile_n) > budget and tile_n > 128:
        tile_n = _round_up(tile_n // 2, 128)

    N_pad = _round_up(N, tile_m)
    out_pad = _round_up(out_dim, tile_n)
    num_m = N_pad // tile_m
    num_n = out_pad // tile_n

    fp = _footprint(tile_m, tile_n)
    vmem_limit = int(min(budget, max(fp, 32 * _MIB)))
    if fp > vmem_limit:   # couldn't re-tile enough; give the compiler the room
        vmem_limit = int(min(fp + 2 * _MIB, vmem_cap - 4 * _MIB))

    # --- cast / transpose / pad outside the kernel (cheap XLA ops) ----------
    xp = jnp.pad(x2.astype(compute_dtype), ((0, N_pad - N), (0, 0)))
    w_org_t = jnp.pad(w_org.T.astype(compute_dtype),
                      ((0, 0), (0, out_pad - out_dim)))
    bias = jnp.pad(b_org.astype(jnp.float32),
                   ((0, out_pad - out_dim),)).reshape(1, out_pad)
    w_down_t = jnp.pad(w_down.T.astype(compute_dtype),
                       ((0, 0), (0, lora_pad - lora_dim)))
    w_up_t = jnp.pad(w_up.T.astype(compute_dtype),
                     ((0, lora_pad - lora_dim), (0, out_pad - out_dim)))

    # --- cost estimate (includes per-row-tile weight re-streaming) ----------
    flops = (2 * N_pad * in_dim * out_pad            # org matmul
             + 2 * N_pad * in_dim * lora_pad         # down-projection (hoisted)
             + 2 * N_pad * lora_pad * out_pad)       # up-projection
    bytes_accessed = int(
        xp.size * cbytes                             # x streamed once
        + (w_org_t.size + w_up_t.size) * cbytes * num_m   # re-streamed / row tile
        + bias.size * 4 * num_m
        + w_down_t.size * cbytes                     # constant index: fetched once
        + N_pad * out_pad * obytes)
    cost = pl.CostEstimate(flops=flops, transcendentals=0,
                           bytes_accessed=bytes_accessed)

    precision = (jax.lax.Precision.HIGHEST
                 if jnp.dtype(compute_dtype) == jnp.dtype(jnp.float32) else None)
    kern = functools.partial(lora_linear_kernel, lora_scale=lora_scale,
                             precision=precision)

    def _call(single_buffer_const):
        wd_kwargs = ({"pipeline_mode": pl.Buffered(1)}
                     if single_buffer_const else {})
        return pl.pallas_call(
            kern,
            out_shape=jax.ShapeDtypeStruct((N_pad, out_pad), out_dtype),
            grid_spec=pltpu.PrefetchScalarGridSpec(
                num_scalar_prefetch=0,
                grid=(num_m, num_n),
                in_specs=[
                    pl.BlockSpec((tile_m, in_dim), lambda i, j: (i, 0)),      # x
                    pl.BlockSpec((in_dim, tile_n), lambda i, j: (0, j)),      # W_org^T
                    pl.BlockSpec((1, tile_n), lambda i, j: (0, j)),           # bias
                    pl.BlockSpec((in_dim, lora_pad), lambda i, j: (0, 0),     # W_down^T
                                 **wd_kwargs),
                    pl.BlockSpec((lora_pad, tile_n), lambda i, j: (0, j)),    # W_up^T
                ],
                out_specs=pl.BlockSpec((tile_m, tile_n), lambda i, j: (i, j)),
                scratch_shapes=[pltpu.VMEM((tile_m, lora_pad), compute_dtype)],
            ),
            compiler_params=pltpu.CompilerParams(
                dimension_semantics=("parallel", "arbitrary"),
                vmem_limit_bytes=vmem_limit),
            cost_estimate=cost,
        )(xp, w_org_t, bias, w_down_t, w_up_t)

    try:
        out = _call(True)
    except Exception:
        # pl.Buffered(1) unsupported on this jax version -> default buffering.
        out = _call(False)

    out = out[:N, :out_dim]
    return out.reshape(*orig_shape[:-1], out_dim)


def _reference(x, w_org, b_org, w_down, w_up, multiplier, alpha, lora_dim):
    hp = jax.lax.Precision.HIGHEST
    org = jnp.einsum("...i,oi->...o", x, w_org, precision=hp) + b_org
    lx = jnp.einsum("...i,ri->...r", x, w_down, precision=hp)
    lx = jnp.einsum("...r,or->...o", lx, w_up, precision=hp)
    return org + lx * multiplier * (alpha / lora_dim)


def _make_case(key, batch, seq, in_dim, out_dim, lora_dim):
    k1, k2, k3, k4, k5 = jax.random.split(key, 5)
    x = jax.random.normal(k1, (batch, seq, in_dim), jnp.float32)
    w_org = jax.random.normal(k2, (out_dim, in_dim), jnp.float32) * 0.1
    b_org = jax.random.normal(k3, (out_dim,), jnp.float32) * 0.1
    # lora_down: kaiming_uniform_(a=sqrt(5)) => U(-1/sqrt(fan_in), 1/sqrt(fan_in))
    bound = 1.0 / (in_dim ** 0.5)
    w_down = jax.random.uniform(k4, (lora_dim, in_dim), jnp.float32,
                                minval=-bound, maxval=bound)
    # PyTorch inits lora_up to zeros; use small nonzero values so the LoRA
    # branch actually exercises the kernel math.
    w_up = jax.random.normal(k5, (out_dim, lora_dim), jnp.float32) * 0.05
    return x, w_org, b_org, w_down, w_up


if __name__ == "__main__":
    key0, key1 = jax.random.split(jax.random.PRNGKey(0))
    multiplier, alpha = 1.0, 1.0

    # Case 1: tiny shapes, auto tiling, f32 compute path -> tight tolerance.
    lora_dim = 4
    x, w_org, b_org, w_down, w_up = _make_case(key0, 2, 8, 32, 32, lora_dim)
    out = lora_linear(x, w_org, b_org, w_down, w_up,
                      multiplier=multiplier, alpha=alpha, lora_dim=lora_dim,
                      compute_dtype=jnp.float32)
    jax.block_until_ready(out)
    ref = _reference(x, w_org, b_org, w_down, w_up, multiplier, alpha, lora_dim)
    assert out.shape == ref.shape
    assert jnp.allclose(out, ref, atol=2e-5, rtol=2e-5), "f32 path mismatch"

    # Case 2: ragged N (18 rows), multi-tile grid (2x2), bf16 weight streaming.
    lora_dim2 = 8
    x2, w_org2, b_org2, w_down2, w_up2 = _make_case(key1, 2, 9, 64, 192, lora_dim2)
    out2 = lora_linear(x2, w_org2, b_org2, w_down2, w_up2,
                       multiplier=multiplier, alpha=alpha, lora_dim=lora_dim2,
                       tile_m=16, tile_n=128, compute_dtype=jnp.bfloat16)
    jax.block_until_ready(out2)
    ref2 = _reference(x2, w_org2, b_org2, w_down2, w_up2,
                      multiplier, alpha, lora_dim2)
    assert out2.shape == ref2.shape
    assert jnp.allclose(out2, ref2, atol=5e-2, rtol=5e-2), "bf16 path mismatch"

    print("KERNEL_OK")
</pallas_src>

<mosaic_0001>
module attributes {stable_mosaic.version = 11 : i64} {
  func.func @lora_linear_kernel(%arg0: i32, %arg1: i32, %arg2: memref<16x32xf32, #tpu.memory_space<vmem>>, %arg3: memref<32x128xf32, #tpu.memory_space<vmem>>, %arg4: memref<1x128xf32, #tpu.memory_space<vmem>>, %arg5: memref<32x128xf32, #tpu.memory_space<vmem>>, %arg6: memref<128x128xf32, #tpu.memory_space<vmem>>, %arg7: memref<16x128xf32, #tpu.memory_space<vmem>>, %arg8: memref<16x128xf32, #tpu.memory_space<vmem>>) attributes {dimension_semantics = [#tpu.dimension_semantics<parallel>, #tpu.dimension_semantics<arbitrary>], iteration_bounds = array<i64: 1, 1>, scalar_prefetch = 0 : i64, scratch_operands = 1 : i64, tpu.core_type = #tpu.core_type<tc>, window_params = [{transform_indices = @transform_0, window_bounds = array<i64: 16, 32>}, {transform_indices = @transform_1, window_bounds = array<i64: 32, 128>}, {transform_indices = @transform_2, window_bounds = array<i64: 1, 128>}, {pipeline_mode = #tpu.pipeline_mode<synchronous>, transform_indices = @transform_3, window_bounds = array<i64: 32, 128>}, {transform_indices = @transform_4, window_bounds = array<i64: 128, 128>}, {transform_indices = @transform_5, window_bounds = array<i64: 16, 128>}]} {
    %c0_i32 = arith.constant 0 : i32
    %0 = arith.cmpi eq, %arg1, %c0_i32 : i32
    %1 = arith.extui %0 : i1 to i32
    %c0_i32_0 = arith.constant 0 : i32
    %2 = arith.cmpi ne, %1, %c0_i32_0 : i32
    scf.if %2 {
      %c0_13 = arith.constant 0 : index
      %c0_14 = arith.constant 0 : index
      %14 = vector.load %arg2[%c0_13, %c0_14] : memref<16x32xf32, #tpu.memory_space<vmem>>, vector<16x32xf32>
      %c0_15 = arith.constant 0 : index
      %c0_16 = arith.constant 0 : index
      %15 = vector.load %arg5[%c0_15, %c0_16] : memref<32x128xf32, #tpu.memory_space<vmem>>, vector<32x128xf32>
      %cst_17 = arith.constant dense<0.000000e+00> : vector<16x128xf32>
      %16 = tpu.matmul %14, %15, %cst_17 {dimension_numbers = #tpu.dot_dimension_numbers<[1], [0], [0], [1], [0, 0, 1, 1], [], []>, precision = #tpu.contract_precision<fp32>} : vector<16x32xf32>, vector<32x128xf32>, vector<16x128xf32> -> vector<16x128xf32>
      %cst_18 = arith.constant 2.500000e-01 : f32
      %17 = vector.broadcast %cst_18 : f32 to vector<16x128xf32>
      %18 = arith.mulf %16, %17 : vector<16x128xf32>
      %c0_19 = arith.constant 0 : index
      %c0_20 = arith.constant 0 : index
      %19 = vector.load %arg8[%c0_19, %c0_20] : memref<16x128xf32, #tpu.memory_space<vmem>>, vector<16x128xf32>
      tpu.vector_store %arg8[%c0_19, %c0_20], %18 {strides = array<i32>} : memref<16x128xf32, #tpu.memory_space<vmem>>, vector<16x128xf32>,
    } else {
    }
    %c0 = arith.constant 0 : index
    %c0_1 = arith.constant 0 : index
    %3 = vector.load %arg2[%c0, %c0_1] : memref<16x32xf32, #tpu.memory_space<vmem>>, vector<16x32xf32>
    %c0_2 = arith.constant 0 : index
    %c0_3 = arith.constant 0 : index
    %4 = vector.load %arg3[%c0_2, %c0_3] : memref<32x128xf32, #tpu.memory_space<vmem>>, vector<32x128xf32>
    %cst = arith.constant dense<0.000000e+00> : vector<16x128xf32>
    %5 = tpu.matmul %3, %4, %cst {dimension_numbers = #tpu.dot_dimension_numbers<[1], [0], [0], [1], [0, 0, 1, 1], [], []>, precision = #tpu.contract_precision<fp32>} : vector<16x32xf32>, vector<32x128xf32>, vector<16x128xf32> -> vector<16x128xf32>
    %c0_4 = arith.constant 0 : index
    %c0_5 = arith.constant 0 : index
    %6 = vector.load %arg8[%c0_4, %c0_5] : memref<16x128xf32, #tpu.memory_space<vmem>>, vector<16x128xf32>
    %c0_6 = arith.constant 0 : index
    %c0_7 = arith.constant 0 : index
    %7 = vector.load %arg6[%c0_6, %c0_7] : memref<128x128xf32, #tpu.memory_space<vmem>>, vector<128x128xf32>
    %cst_8 = arith.constant dense<0.000000e+00> : vector<16x128xf32>
    %8 = tpu.matmul %6, %7, %cst_8 {dimension_numbers = #tpu.dot_dimension_numbers<[1], [0], [0], [1], [0, 0, 1, 1], [], []>, precision = #tpu.contract_precision<fp32>} : vector<16x128xf32>, vector<128x128xf32>, vector<16x128xf32> -> vector<16x128xf32>
    %9 = arith.addf %5, %8 : vector<16x128xf32>
    %c0_9 = arith.constant 0 : index
    %c0_10 = arith.constant 0 : index
    %10 = vector.load %arg4[%c0_9, %c0_10] : memref<1x128xf32, #tpu.memory_space<vmem>>, vector<1x128xf32>
    %11 = vector.broadcast %10 : vector<1x128xf32> to vector<16x128xf32>
    %12 = arith.addf %9, %11 : vector<16x128xf32>
    %c0_11 = arith.constant 0 : index
    %c0_12 = arith.constant 0 : index
    %13 = vector.load %arg7[%c0_11, %c0_12] : memref<16x128xf32, #tpu.memory_space<vmem>>, vector<16x128xf32>
    tpu.vector_store %arg7[%c0_11, %c0_12], %12 {strides = array<i32>} : memref<16x128xf32, #tpu.memory_space<vmem>>, vector<16x128xf32>,
    return
  }
  func.func @transform_0(%arg0: i32, %arg1: i32) -> (i32, i32) {
    %c0_i32 = arith.constant 0 : i32
    %c0_i32_0 = arith.constant 0 : i32
    return %arg0, %c0_i32 : i32, i32
  }
  func.func @transform_1(%arg0: i32, %arg1: i32) -> (i32, i32) {
    %c0_i32 = arith.constant 0 : i32
    %c0_i32_0 = arith.constant 0 : i32
    return %c0_i32, %arg1 : i32, i32
  }
  func.func @transform_2(%arg0: i32, %arg1: i32) -> (i32, i32) {
    %c0_i32 = arith.constant 0 : i32
    %c0_i32_0 = arith.constant 0 : i32
    return %c0_i32, %arg1 : i32, i32
  }
  func.func @transform_3(%arg0: i32, %arg1: i32) -> (i32, i32) {
    %c0_i32 = arith.constant 0 : i32
    %c0_i32_0 = arith.constant 0 : i32
    %c0_i32_1 = arith.constant 0 : i32
    return %c0_i32, %c0_i32_0 : i32, i32
  }
  func.func @transform_4(%arg0: i32, %arg1: i32) -> (i32, i32) {
    %c0_i32 = arith.constant 0 : i32
    %c0_i32_0 = arith.constant 0 : i32
    return %c0_i32, %arg1 : i32, i32
  }
  func.func @transform_5(%arg0: i32, %arg1: i32) -> (i32, i32) {
    %c0_i32 = arith.constant 0 : i32
    return %arg0, %arg1 : i32, i32
  }
}

module attributes {stable_mosaic.version = 11 : i64} {
  func.func @lora_linear_kernel(%arg0: i32, %arg1: i32, %arg2: memref<16x32xf32, #tpu.memory_space<vmem>>, %arg3: memref<32x128xf32, #tpu.memory_space<vmem>>, %arg4: memref<1x128xf32, #tpu.memory_space<vmem>>, %arg5: memref<32x128xf32, #tpu.memory_space<vmem>>, %arg6: memref<128x128xf32, #tpu.memory_space<vmem>>, %arg7: memref<16x128xf32, #tpu.memory_space<vmem>>, %arg8: memref<16x128xf32, #tpu.memory_space<vmem>>) attributes {dimension_semantics = [#tpu.dimension_semantics<parallel>, #tpu.dimension_semantics<arbitrary>], iteration_bounds = array<i64: 1, 1>, scalar_prefetch = 0 : i64, scratch_operands = 1 : i64, tpu.core_type = #tpu.core_type<tc>, window_params = [{transform_indices = @transform_0, window_bounds = array<i64: 16, 32>}, {transform_indices = @transform_1, window_bounds = array<i64: 32, 128>}, {transform_indices = @transform_2, window_bounds = array<i64: 1, 128>}, {pipeline_mode = #tpu.pipeline_mode<synchronous>, transform_indices = @transform_3, window_bounds = array<i64: 32, 128>}, {transform_indices = @transform_4, window_bounds = array<i64: 128, 128>}, {transform_indices = @transform_5, window_bounds = array<i64: 16, 128>}]} {
    %c0_i32 = arith.constant 0 : i32
    %0 = arith.cmpi eq, %arg1, %c0_i32 : i32
    %1 = arith.extui %0 : i1 to i32
    %c0_i32_0 = arith.constant 0 : i32
    %2 = arith.cmpi ne, %1, %c0_i32_0 : i32
    scf.if %2 {
      %c0_13 = arith.constant 0 : index
      %c0_14 = arith.constant 0 : index
      %14 = vector.load %arg2[%c0_13, %c0_14] : memref<16x32xf32, #tpu.memory_space<vmem>>, vector<16x32xf32>
      %c0_15 = arith.constant 0 : index
      %c0_16 = arith.constant 0 : index
      %15 = vector.load %arg5[%c0_15, %c0_16] : memref<32x128xf32, #tpu.memory_space<vmem>>, vector<32x128xf32>
      %cst_17 = arith.constant dense<0.000000e+00> : vector<16x128xf32>
      %16 = tpu.matmul %14, %15, %cst_17 {dimension_numbers = #tpu.dot_dimension_numbers<[1], [0], [0], [1], [0, 0, 1, 1], [], []>, precision = #tpu.contract_precision<fp32>} : vector<16x32xf32>, vector<32x128xf32>, vector<16x128xf32> -> vector<16x128xf32>
      %cst_18 = arith.constant 2.500000e-01 : f32
      %17 = vector.broadcast %cst_18 : f32 to vector<16x128xf32>
      %18 = arith.mulf %16, %17 : vector<16x128xf32>
      %c0_19 = arith.constant 0 : index
      %c0_20 = arith.constant 0 : index
      %19 = vector.load %arg8[%c0_19, %c0_20] : memref<16x128xf32, #tpu.memory_space<vmem>>, vector<16x128xf32>
      tpu.vector_store %arg8[%c0_19, %c0_20], %18 {strides = array<i32>} : memref<16x128xf32, #tpu.memory_space<vmem>>, vector<16x128xf32>,
    } else {
    }
    %c0 = arith.constant 0 : index
    %c0_1 = arith.constant 0 : index
    %3 = vector.load %arg2[%c0, %c0_1] : memref<16x32xf32, #tpu.memory_space<vmem>>, vector<16x32xf32>
    %c0_2 = arith.constant 0 : index
    %c0_3 = arith.constant 0 : index
    %4 = vector.load %arg3[%c0_2, %c0_3] : memref<32x128xf32, #tpu.memory_space<vmem>>, vector<32x128xf32>
    %cst = arith.constant dense<0.000000e+00> : vector<16x128xf32>
    %5 = tpu.matmul %3, %4, %cst {dimension_numbers = #tpu.dot_dimension_numbers<[1], [0], [0], [1], [0, 0, 1, 1], [], []>, precision = #tpu.contract_precision<fp32>} : vector<16x32xf32>, vector<32x128xf32>, vector<16x128xf32> -> vector<16x128xf32>
    %c0_4 = arith.constant 0 : index
    %c0_5 = arith.constant 0 : index
    %6 = vector.load %arg8[%c0_4, %c0_5] : memref<16x128xf32, #tpu.memory_space<vmem>>, vector<16x128xf32>
    %c0_6 = arith.constant 0 : index
    %c0_7 = arith.constant 0 : index
    %7 = vector.load %arg6[%c0_6, %c0_7] : memref<128x128xf32, #tpu.memory_space<vmem>>, vector<128x128xf32>
    %cst_8 = arith.constant dense<0.000000e+00> : vector<16x128xf32>
    %8 = tpu.matmul %6, %7, %cst_8 {dimension_numbers = #tpu.dot_dimension_numbers<[1], [0], [0], [1], [0, 0, 1, 1], [], []>, precision = #tpu.contract_precision<fp32>} : vector<16x128xf32>, vector<128x128xf32>, vector<16x128xf32> -> vector<16x128xf32>
    %9 = arith.addf %5, %8 : vector<16x128xf32>
    %c0_9 = arith.constant 0 : index
    %c0_10 = arith.constant 0 : index
    %10 = vector.load %arg4[%c0_9, %c0_10] : memref<1x128xf32, #tpu.memory_space<vmem>>, vector<1x128xf32>
    %11 = vector.broadcast %10 : vector<1x128xf32> to vector<16x128xf32>
    %12 = arith.addf %9, %11 : vector<16x128xf32>
    %c0_11 = arith.constant 0 : index
    %c0_12 = arith.constant 0 : index
    %13 = vector.load %arg7[%c0_11, %c0_12] : memref<16x128xf32, #tpu.memory_space<vmem>>, vector<16x128xf32>
    tpu.vector_store %arg7[%c0_11, %c0_12], %12 {strides = array<i32>} : memref<16x128xf32, #tpu.memory_space<vmem>>, vector<16x128xf32>,
    return
  }
  func.func @transform_0(%arg0: i32, %arg1: i32) -> (i32, i32) {
    %c0_i32 = arith.constant 0 : i32
    %c0_i32_0 = arith.constant 0 : i32
    return %arg0, %c0_i32 : i32, i32
  }
  func.func @transform_1(%arg0: i32, %arg1: i32) -> (i32, i32) {
    %c0_i32 = arith.constant 0 : i32
    %c0_i32_0 = arith.constant 0 : i32
    return %c0_i32, %arg1 : i32, i32
  }
  func.func @transform_2(%arg0: i32, %arg1: i32) -> (i32, i32) {
    %c0_i32 = arith.constant 0 : i32
    %c0_i32_0 = arith.constant 0 : i32
    return %c0_i32, %arg1 : i32, i32
  }
  func.func @transform_3(%arg0: i32, %arg1: i32) -> (i32, i32) {
    %c0_i32 = arith.constant 0 : i32
    %c0_i32_0 = arith.constant 0 : i32
    %c0_i32_1 = arith.constant 0 : i32
    return %c0_i32, %c0_i32_0 : i32, i32
  }
  func.func @transform_4(%arg0: i32, %arg1: i32) -> (i32, i32) {
    %c0_i32 = arith.constant 0 : i32
    %c0_i32_0 = arith.constant 0 : i32
    return %c0_i32, %arg1 : i32, i32
  }
  func.func @transform_5(%arg0: i32, %arg1: i32) -> (i32, i32) {
    %c0_i32 = arith.constant 0 : i32
    return %arg0, %arg1 : i32, i32
  }
}

</mosaic_0001>

<llo_original>
// kernel: tpu_custom_call.1
$region0: #{tpu_custom_call.1}
  #allocation0 [shape = 'u32[]', space=smem, size = 0x4, offset = 0x4, fixed_abs, tag = 'smem constant byte address 0x4 - core index']
  #allocation1 [shape = 'u32[72,128]{1,0:T(1,128)}', space=vmem, size = 0x9000, scoped, tag = 'internal scratch']
  #allocation2 [shape = 'f32[16,128]{1,0:T(8,128)}', space=vmem, size = 0x2000, scoped, tag = 'scratch operand']
  %s0 = inlined_call_operand.hbm [shape: f32[16,32], index: 0, kind: input, shape index: {}]
  %s1 = inlined_call_operand.hbm [shape: f32[32,128], index: 1, kind: input, shape index: {}]
  %s2 = inlined_call_operand.vmem [shape: f32[1,128], index: 2, kind: input, shape index: {}]
  %s3 = inlined_call_operand.hbm [shape: f32[32,128], index: 3, kind: input, shape index: {}]
  %s4 = inlined_call_operand.hbm [shape: f32[128,128], index: 4, kind: input, shape index: {}]
  %s5 = inlined_call_operand.hbm [shape: f32[16,128], index: 5, kind: output, shape index: {}]
  %s6 = sld [smem:[#allocation0]]
  $region50: #{tpu_custom_call.1} parent=0
    _
  %s8 = ssub.s32 1, %s6
  %s9 = scalar_select 0, %s8, %s6
  $region1: #{tpu_custom_call.1} parent=0
    #allocation3 [shape = 'u8[8192]{0}', space=vmem, size = 0x2000, scoped, tag = 'input window, operand 0, single buffered']
    #allocation4 [shape = 's32[1]{0}', space=sflag, size = 0x4, scoped, tag = 'scoped memory for tpu_custom_call.1']
    #allocation5 [shape = 's32[1]{0}', space=sflag, size = 0x4, scoped, tag = 'scoped memory for tpu_custom_call.1']
    #allocation6 [shape = 'u8[16384]{0}', space=vmem, size = 0x4000, scoped, tag = 'input window, operand 1, single buffered']
    #allocation7 [shape = 's32[1]{0}', space=sflag, size = 0x4, scoped, tag = 'scoped memory for tpu_custom_call.1']
    #allocation8 [shape = 'u8[16384]{0}', space=vmem, size = 0x4000, scoped, tag = 'input window, operand 3, single buffered']
    #allocation9 [shape = 'u8[65536]{0}', space=vmem, size = 0x10000, scoped, tag = 'input window, operand 4, single buffered']
    #allocation10 [shape = 's32[1]{0}', space=sflag, size = 0x4, scoped, tag = 'scoped memory for tpu_custom_call.1']
    #allocation11 [shape = 'u8[8192]{0}', space=vmem, size = 0x2000, scoped, tag = 'output window, operand 0, single buffered']
    %10 = vsyncpa [#allocation4], 0
    %11 = vsyncpa [#allocation7], 0
    %12 = vsyncpa [#allocation10], 0
    %13 = vsyncpa [#allocation5], 0
    // Predicated region
    $region2: #{tpu_custom_call.1} parent=1 // pred_check
      _
    $region3: #{tpu_custom_call.1} parent=1 // pred_check_branch
      %15 = sbr.rel (0) target = $region5
    $region4: #{tpu_custom_call.1} parent=1 // pred_region
      %17 = vsyncadd [#allocation4], 0
      %s18 = sshll.u32 %s0, 4
      %s19 = int_to_ptr.hbm [resolvable:$true] %s18
      %s20 = sshll.u32 [#allocation3], 4
      %s21 = int_to_ptr.vmem [resolvable:$true] %s20
      %26 = dma.hbm_to_vmem [thread:$0]  %s19, 256, %s21, [#allocation4], 128, 128, 8
    $region5: #{tpu_custom_call.1} parent=1 // pred_fallthru
      _
    // Predicated region
    $region6: #{tpu_custom_call.1} parent=1 // pred_check
      _
    $region7: #{tpu_custom_call.1} parent=1 // pred_check_branch
      %28 = sbr.rel (0) target = $region9
    $region8: #{tpu_custom_call.1} parent=1 // pred_region
      %30 = vsyncadd [#allocation7], 0
      %s31 = sshll.u32 %s1, 4
      %s32 = int_to_ptr.hbm [resolvable:$true] %s31
      %s33 = sshll.u32 [#allocation6], 4
      %s34 = int_to_ptr.vmem [resolvable:$true] %s33
      %39 = dma.hbm_to_vmem [thread:$0]  %s32, 512, %s34, [#allocation7], 128, 128, 8
    $region9: #{tpu_custom_call.1} parent=1 // pred_fallthru
      _
    // Predicated region
    $region10: #{tpu_custom_call.1} parent=1 // pred_check
      _
    $region11: #{tpu_custom_call.1} parent=1 // pred_check_branch
      %41 = sbr.rel (0) target = $region13
    $region12: #{tpu_custom_call.1} parent=1 // pred_region
      _
    $region13: #{tpu_custom_call.1} parent=1 // pred_fallthru
      _
    // Predicated region
    $region14: #{tpu_custom_call.1} parent=1 // pred_check
      _
    $region15: #{tpu_custom_call.1} parent=1 // pred_check_branch
      %43 = sbr.rel (0) target = $region17
    $region16: #{tpu_custom_call.1} parent=1 // pred_region
      %45 = vsyncadd [#allocation7], 0
      %s46 = sshll.u32 %s3, 4
      %s47 = int_to_ptr.hbm [resolvable:$true] %s46
      %s48 = sshll.u32 [#allocation8], 4
      %s49 = int_to_ptr.vmem [resolvable:$true] %s48
      %54 = dma.hbm_to_vmem [thread:$0]  %s47, 512, %s49, [#allocation7], 128, 128, 8
    $region17: #{tpu_custom_call.1} parent=1 // pred_fallthru
      _
    // Predicated region
    $region18: #{tpu_custom_call.1} parent=1 // pred_check
      _
    $region19: #{tpu_custom_call.1} parent=1 // pred_check_branch
      %56 = sbr.rel (0) target = $region21
    $region20: #{tpu_custom_call.1} parent=1 // pred_region
      %58 = vsyncadd [#allocation10], 0
      %s59 = sshll.u32 %s4, 4
      %s60 = int_to_ptr.hbm [resolvable:$true] %s59
      %s61 = sshll.u32 [#allocation9], 4
      %s62 = int_to_ptr.vmem [resolvable:$true] %s61
      %67 = dma.hbm_to_vmem [thread:$0]  %s60, 2048, %s62, [#allocation10], 128, 128, 8
    $region21: #{tpu_custom_call.1} parent=1 // pred_fallthru
      _
    // Predicated region
    $region22: #{tpu_custom_call.1} parent=1 // pred_check
      _
    $region23: #{tpu_custom_call.1} parent=1 // pred_check_branch
      %69 = sbr.rel (0) target = $region25
    $region24: #{tpu_custom_call.1} parent=1 // pred_region
      %71 = dma.done [#allocation4], 256
    $region25: #{tpu_custom_call.1} parent=1 // pred_fallthru
      _
    // Predicated region
    $region26: #{tpu_custom_call.1} parent=1 // pred_check
      _
    $region27: #{tpu_custom_call.1} parent=1 // pred_check_branch
      %73 = sbr.rel (0) target = $region29
    $region28: #{tpu_custom_call.1} parent=1 // pred_region
      %75 = dma.done [#allocation7], 512
    $region29: #{tpu_custom_call.1} parent=1 // pred_fallthru
      _
    // Predicated region
    $region30: #{tpu_custom_call.1} parent=1 // pred_check
      _
    $region31: #{tpu_custom_call.1} parent=1 // pred_check_branch
      %77 = sbr.rel (0) target = $region33
    $region32: #{tpu_custom_call.1} parent=1 // pred_region
      %79 = dma.done [#allocation7], 512
    $region33: #{tpu_custom_call.1} parent=1 // pred_fallthru
      _
    // Predicated region
    $region34: #{tpu_custom_call.1} parent=1 // pred_check
      _
    $region35: #{tpu_custom_call.1} parent=1 // pred_check_branch
      %81 = sbr.rel (0) target = $region37
    $region36: #{tpu_custom_call.1} parent=1 // pred_region
      %83 = dma.done [#allocation10], 2048
    $region37: #{tpu_custom_call.1} parent=1 // pred_fallthru
      _
    %p84 = scmp.eq.s32.totalorder 0, 0
    // Predicated region
    $region38: #{tpu_custom_call.1} parent=1 // pred_check
      %p85 = pneg %p84
    $region39: #{tpu_custom_call.1} parent=1 // pred_check_branch
      %87 = sbr.rel (%p85) target = $region41
    $region40: #{tpu_custom_call.1} parent=1 // pred_region
      %v88 = vld [vmem:[#allocation3] sm:$0xff]
      %v89 = vld [vmem:[#allocation3 + $0x8] sm:$0xff]
      %v90 = vld [vmem:[#allocation8] sm:$0xff]
      %v91 = vld [vmem:[#allocation8 + $0x8] sm:$0xff]
      %v92 = vld [vmem:[#allocation8 + $0x10] sm:$0xff]
      %v93 = vld [vmem:[#allocation8 + $0x18] sm:$0xff]
      %vm94 = vcmask 261120
      %v96 = vsel %vm94, %v88, 0
      %v99 = vsel %vm94, %v89, 0
      %101 = vmatpush.msra.mxu0 0.0
      %102 = vmatpush.msra.mxu0 0.0
      %103 = vmatpush.msra.mxu0 0.0
      %104 = vmatpush.msra.mxu0 0.0
      %105 = vmatpush.msra.mxu0 0.0
      %106 = vmatpush.msra.mxu0 0.0
      %107 = vmatpush.msra.mxu0 0.0
      %108 = vmatpush.msra.mxu0 0.0
      %109 = vmatpush.msra.mxu0 0.0
      %110 = vmatpush.msra.mxu0 0.0
      %111 = vmatpush.msra.mxu0 0.0
      %112 = vmatpush.msra.mxu0 0.0
      %v113 = vand.u32 %v93, 4294901760
      %114 = vmatpush.msra.mxu0 %v113
      %v115 = vand.u32 %v92, 4294901760
      %116 = vmatpush.msra.mxu0 %v115
      %v117 = vand.u32 %v91, 4294901760
      %118 = vmatpush.msra.mxu0 %v117
      %v119 = vand.u32 %v90, 4294901760
      %120 = vmatpush.msra.mxu0 %v119
      %v121 = vand.u32 %v96, 4294901760
      %v122 = vsub.f32 %v96, %v121
      %v123 = vand.u32 %v122, 4294901760
      %v124 = vsub.f32 %v122, %v123
      %v125 = vand.u32 %v124, 4294901760
      %126 = vmatmul.f32.gmra.mxu0 %v125
      %v127 = vpop.f32.mrf.mxu0
      %v128 = vadd.f32 0.0, %v127
      %v129 = vand.u32 %v99, 4294901760
      %v130 = vsub.f32 %v99, %v129
      %v131 = vand.u32 %v130, 4294901760
      %v132 = vsub.f32 %v130, %v131
      %v133 = vand.u32 %v132, 4294901760
      %134 = vmatmul.f32.gmra.mxu0 %v133
      %v135 = vpop.f32.mrf.mxu0
      %v136 = vadd.f32 0.0, %v135
      %137 = vdwg.mxu0
      %138 = vmatpush.msra.mxu0 0.0
      %139 = vmatpush.msra.mxu0 0.0
      %140 = vmatpush.msra.mxu0 0.0
      %141 = vmatpush.msra.mxu0 0.0
      %142 = vmatpush.msra.mxu0 0.0
      %143 = vmatpush.msra.mxu0 0.0
      %144 = vmatpush.msra.mxu0 0.0
      %145 = vmatpush.msra.mxu0 0.0
      %146 = vmatpush.msra.mxu0 0.0
      %147 = vmatpush.msra.mxu0 0.0
      %148 = vmatpush.msra.mxu0 0.0
      %149 = vmatpush.msra.mxu0 0.0
      %v150 = vand.u32 %v93, 4294901760
      %v151 = vsub.f32 %v93, %v150
      %v152 = vand.u32 %v151, 4294901760
      %v153 = vsub.f32 %v151, %v152
      %v154 = vand.u32 %v153, 4294901760
      %155 = vmatpush.msra.mxu0 %v154
      %v156 = vand.u32 %v92, 4294901760
      %v157 = vsub.f32 %v92, %v156
      %v158 = vand.u32 %v157, 4294901760
      %v159 = vsub.f32 %v157, %v158
      %v160 = vand.u32 %v159, 4294901760
      %161 = vmatpush.msra.mxu0 %v160
      %v162 = vand.u32 %v91, 4294901760
      %v163 = vsub.f32 %v91, %v162
      %v164 = vand.u32 %v163, 4294901760
      %v165 = vsub.f32 %v163, %v164
      %v166 = vand.u32 %v165, 4294901760
      %167 = vmatpush.msra.mxu0 %v166
      %v168 = vand.u32 %v90, 4294901760
      %v169 = vsub.f32 %v90, %v168
      %v170 = vand.u32 %v169, 4294901760
      %v171 = vsub.f32 %v169, %v170
      %v172 = vand.u32 %v171, 4294901760
      %173 = vmatpush.msra.mxu0 %v172
      %v174 = vand.u32 %v96, 4294901760
      %175 = vmatmul.f32.gmra.mxu0 %v174
      %v176 = vpop.f32.mrf.mxu0
      %v177 = vadd.f32 %v128, %v176
      %v178 = vand.u32 %v99, 4294901760
      %179 = vmatmul.f32.gmra.mxu0 %v178
      %v180 = vpop.f32.mrf.mxu0
      %v181 = vadd.f32 %v136, %v180
      %182 = vdwg.mxu0
      %183 = vmatpush.msra.mxu0 0.0
      %184 = vmatpush.msra.mxu0 0.0
      %185 = vmatpush.msra.mxu0 0.0
      %186 = vmatpush.msra.mxu0 0.0
      %187 = vmatpush.msra.mxu0 0.0
      %188 = vmatpush.msra.mxu0 0.0
      %189 = vmatpush.msra.mxu0 0.0
      %190 = vmatpush.msra.mxu0 0.0
      %191 = vmatpush.msra.mxu0 0.0
      %192 = vmatpush.msra.mxu0 0.0
      %193 = vmatpush.msra.mxu0 0.0
      %194 = vmatpush.msra.mxu0 0.0
      %v195 = vand.u32 %v93, 4294901760
      %v196 = vsub.f32 %v93, %v195
      %197 = vmatpush.msra.mxu0 %v196
      %v198 = vand.u32 %v92, 4294901760
      %v199 = vsub.f32 %v92, %v198
      %200 = vmatpush.msra.mxu0 %v199
      %v201 = vand.u32 %v91, 4294901760
      %v202 = vsub.f32 %v91, %v201
      %203 = vmatpush.msra.mxu0 %v202
      %v204 = vand.u32 %v90, 4294901760
      %v205 = vsub.f32 %v90, %v204
      %206 = vmatpush.msra.mxu0 %v205
      %v207 = vand.u32 %v96, 4294901760
      %v208 = vsub.f32 %v96, %v207
      %209 = vmatmul.f32.gmra.mxu0 %v208
      %v210 = vpop.f32.mrf.mxu0
      %v211 = vadd.f32 %v177, %v210
      %v212 = vand.u32 %v99, 4294901760
      %v213 = vsub.f32 %v99, %v212
      %214 = vmatmul.f32.gmra.mxu0 %v213
      %v215 = vpop.f32.mrf.mxu0
      %v216 = vadd.f32 %v181, %v215
      %217 = vdwg.mxu0
      %218 = vmatpush.msra.mxu0 0.0
      %219 = vmatpush.msra.mxu0 0.0
      %220 = vmatpush.msra.mxu0 0.0
      %221 = vmatpush.msra.mxu0 0.0
      %222 = vmatpush.msra.mxu0 0.0
      %223 = vmatpush.msra.mxu0 0.0
      %224 = vmatpush.msra.mxu0 0.0
      %225 = vmatpush.msra.mxu0 0.0
      %226 = vmatpush.msra.mxu0 0.0
      %227 = vmatpush.msra.mxu0 0.0
      %228 = vmatpush.msra.mxu0 0.0
      %229 = vmatpush.msra.mxu0 0.0
      %v230 = vand.u32 %v93, 4294901760
      %231 = vmatpush.msra.mxu0 %v230
      %v232 = vand.u32 %v92, 4294901760
      %233 = vmatpush.msra.mxu0 %v232
      %v234 = vand.u32 %v91, 4294901760
      %235 = vmatpush.msra.mxu0 %v234
      %v236 = vand.u32 %v90, 4294901760
      %237 = vmatpush.msra.mxu0 %v236
      %v238 = vand.u32 %v96, 4294901760
      %v239 = vsub.f32 %v96, %v238
      %v240 = vand.u32 %v239, 4294901760
      %241 = vmatmul.f32.gmra.mxu0 %v240
      %v242 = vpop.f32.mrf.mxu0
      %v243 = vadd.f32 %v211, %v242
      %v244 = vand.u32 %v99, 4294901760
      %v245 = vsub.f32 %v99, %v244
      %v246 = vand.u32 %v245, 4294901760
      %247 = vmatmul.f32.gmra.mxu0 %v246
      %v248 = vpop.f32.mrf.mxu0
      %v249 = vadd.f32 %v216, %v248
      %250 = vdwg.mxu0
      %251 = vmatpush.msra.mxu0 0.0
      %252 = vmatpush.msra.mxu0 0.0
      %253 = vmatpush.msra.mxu0 0.0
      %254 = vmatpush.msra.mxu0 0.0
      %255 = vmatpush.msra.mxu0 0.0
      %256 = vmatpush.msra.mxu0 0.0
      %257 = vmatpush.msra.mxu0 0.0
      %258 = vmatpush.msra.mxu0 0.0
      %259 = vmatpush.msra.mxu0 0.0
      %260 = vmatpush.msra.mxu0 0.0
      %261 = vmatpush.msra.mxu0 0.0
      %262 = vmatpush.msra.mxu0 0.0
      %v263 = vand.u32 %v93, 4294901760
      %v264 = vsub.f32 %v93, %v263
      %v265 = vand.u32 %v264, 4294901760
      %266 = vmatpush.msra.mxu0 %v265
      %v267 = vand.u32 %v92, 4294901760
      %v268 = vsub.f32 %v92, %v267
      %v269 = vand.u32 %v268, 4294901760
      %270 = vmatpush.msra.mxu0 %v269
      %v271 = vand.u32 %v91, 4294901760
      %v272 = vsub.f32 %v91, %v271
      %v273 = vand.u32 %v272, 4294901760
      %274 = vmatpush.msra.mxu0 %v273
      %v275 = vand.u32 %v90, 4294901760
      %v276 = vsub.f32 %v90, %v275
      %v277 = vand.u32 %v276, 4294901760
      %278 = vmatpush.msra.mxu0 %v277
      %v279 = vand.u32 %v96, 4294901760
      %280 = vmatmul.f32.gmra.mxu0 %v279
      %v281 = vpop.f32.mrf.mxu0
      %v282 = vadd.f32 %v243, %v281
      %v283 = vand.u32 %v99, 4294901760
      %284 = vmatmul.f32.gmra.mxu0 %v283
      %v285 = vpop.f32.mrf.mxu0
      %v286 = vadd.f32 %v249, %v285
      %287 = vdwg.mxu0
      %288 = vmatpush.msra.mxu0 0.0
      %289 = vmatpush.msra.mxu0 0.0
      %290 = vmatpush.msra.mxu0 0.0
      %291 = vmatpush.msra.mxu0 0.0
      %292 = vmatpush.msra.mxu0 0.0
      %293 = vmatpush.msra.mxu0 0.0
      %294 = vmatpush.msra.mxu0 0.0
      %295 = vmatpush.msra.mxu0 0.0
      %296 = vmatpush.msra.mxu0 0.0
      %297 = vmatpush.msra.mxu0 0.0
      %298 = vmatpush.msra.mxu0 0.0
      %299 = vmatpush.msra.mxu0 0.0
      %v300 = vand.u32 %v93, 4294901760
      %301 = vmatpush.msra.mxu0 %v300
      %v302 = vand.u32 %v92, 4294901760
      %303 = vmatpush.msra.mxu0 %v302
      %v304 = vand.u32 %v91, 4294901760
      %305 = vmatpush.msra.mxu0 %v304
      %v306 = vand.u32 %v90, 4294901760
      %307 = vmatpush.msra.mxu0 %v306
      %v308 = vand.u32 %v96, 4294901760
      %309 = vmatmul.f32.gmra.mxu0 %v308
      %v310 = vpop.f32.mrf.mxu0
      %v311 = vadd.f32 %v282, %v310
      %v312 = vand.u32 %v99, 4294901760
      %313 = vmatmul.f32.gmra.mxu0 %v312
      %v314 = vpop.f32.mrf.mxu0
      %v315 = vadd.f32 %v286, %v314
      %316 = vdwg.mxu0
      %v317 = vmul.f32 %v311, 0.25
      %v318 = vmul.f32 %v315, 0.25
      %319 = vst [vmem:[#allocation2] sm:$0xff] %v317
      %320 = vst [vmem:[#allocation2 + $0x8] sm:$0xff] %v318
    $region41: #{tpu_custom_call.1} parent=1 // pred_fallthru
      _
    %v321 = vld [vmem:[#allocation3] sm:$0xff]
    %v322 = vld [vmem:[#allocation3 + $0x8] sm:$0xff]
    %v323 = vld [vmem:[#allocation6] sm:$0xff]
    %v324 = vld [vmem:[#allocation6 + $0x8] sm:$0xff]
    %v325 = vld [vmem:[#allocation6 + $0x10] sm:$0xff]
    %v326 = vld [vmem:[#allocation6 + $0x18] sm:$0xff]
    %v327 = vld [vmem:[#allocation2] sm:$0xff]
    %v328 = vld [vmem:[#allocation2 + $0x8] sm:$0xff]
    %v329 = vld [vmem:[#allocation9] sm:$0xff]
    %v330 = vld [vmem:[#allocation9 + $0x8] sm:$0xff]
    %v331 = vld [vmem:[#allocation9 + $0x10] sm:$0xff]
    %v332 = vld [vmem:[#allocation9 + $0x18] sm:$0xff]
    %v333 = vld [vmem:[#allocation9 + $0x20] sm:$0xff]
    %v334 = vld [vmem:[#allocation9 + $0x28] sm:$0xff]
    %v335 = vld [vmem:[#allocation9 + $0x30] sm:$0xff]
    %v336 = vld [vmem:[#allocation9 + $0x38] sm:$0xff]
    %v337 = vld [vmem:[#allocation9 + $0x40] sm:$0xff]
    %v338 = vld [vmem:[#allocation9 + $0x48] sm:$0xff]
    %v339 = vld [vmem:[#allocation9 + $0x50] sm:$0xff]
    %v340 = vld [vmem:[#allocation9 + $0x58] sm:$0xff]
    %v341 = vld [vmem:[#allocation9 + $0x60] sm:$0xff]
    %v342 = vld [vmem:[#allocation9 + $0x68] sm:$0xff]
    %v343 = vld [vmem:[#allocation9 + $0x70] sm:$0xff]
    %v344 = vld [vmem:[#allocation9 + $0x78] sm:$0xff]
    %v345 = vand.u32 %v344, 4294901760
    %346 = vmatpush.msra.mxu0 %v345
    %v347 = vand.u32 %v343, 4294901760
    %348 = vmatpush.msra.mxu0 %v347
    %v349 = vand.u32 %v342, 4294901760
    %350 = vmatpush.msra.mxu0 %v349
    %v351 = vand.u32 %v341, 4294901760
    %352 = vmatpush.msra.mxu0 %v351
    %v353 = vand.u32 %v340, 4294901760
    %354 = vmatpush.msra.mxu0 %v353
    %v355 = vand.u32 %v339, 4294901760
    %356 = vmatpush.msra.mxu0 %v355
    %v357 = vand.u32 %v338, 4294901760
    %358 = vmatpush.msra.mxu0 %v357
    %v359 = vand.u32 %v337, 4294901760
    %360 = vmatpush.msra.mxu0 %v359
    %v361 = vand.u32 %v336, 4294901760
    %362 = vmatpush.msra.mxu0 %v361
    %v363 = vand.u32 %v335, 4294901760
    %364 = vmatpush.msra.mxu0 %v363
    %v365 = vand.u32 %v334, 4294901760
    %366 = vmatpush.msra.mxu0 %v365
    %v367 = vand.u32 %v333, 4294901760
    %368 = vmatpush.msra.mxu0 %v367
    %v369 = vand.u32 %v332, 4294901760
    %370 = vmatpush.msra.mxu0 %v369
    %v371 = vand.u32 %v331, 4294901760
    %372 = vmatpush.msra.mxu0 %v371
    %v373 = vand.u32 %v330, 4294901760
    %374 = vmatpush.msra.mxu0 %v373
    %v375 = vand.u32 %v329, 4294901760
    %376 = vmatpush.msra.mxu0 %v375
    %v377 = vand.u32 %v327, 4294901760
    %v378 = vsub.f32 %v327, %v377
    %v379 = vand.u32 %v378, 4294901760
    %v380 = vsub.f32 %v378, %v379
    %v381 = vand.u32 %v380, 4294901760
    %382 = vmatmul.f32.gmra.mxu0 %v381
    %v383 = vpop.f32.mrf.mxu0
    %v384 = vadd.f32 0.0, %v383
    %v385 = vand.u32 %v328, 4294901760
    %v386 = vsub.f32 %v328, %v385
    %v387 = vand.u32 %v386, 4294901760
    %v388 = vsub.f32 %v386, %v387
    %v389 = vand.u32 %v388, 4294901760
    %390 = vmatmul.f32.gmra.mxu0 %v389
    %v391 = vpop.f32.mrf.mxu0
    %v392 = vadd.f32 0.0, %v391
    %393 = vdwg.mxu0
    %v394 = vand.u32 %v344, 4294901760
    %v395 = vsub.f32 %v344, %v394
    %v396 = vand.u32 %v395, 4294901760
    %v397 = vsub.f32 %v395, %v396
    %v398 = vand.u32 %v397, 4294901760
    %399 = vmatpush.msra.mxu0 %v398
    %v400 = vand.u32 %v343, 4294901760
    %v401 = vsub.f32 %v343, %v400
    %v402 = vand.u32 %v401, 4294901760
    %v403 = vsub.f32 %v401, %v402
    %v404 = vand.u32 %v403, 4294901760
    %405 = vmatpush.msra.mxu0 %v404
    %v406 = vand.u32 %v342, 4294901760
    %v407 = vsub.f32 %v342, %v406
    %v408 = vand.u32 %v407, 4294901760
    %v409 = vsub.f32 %v407, %v408
    %v410 = vand.u32 %v409, 4294901760
    %411 = vmatpush.msra.mxu0 %v410
    %v412 = vand.u32 %v341, 4294901760
    %v413 = vsub.f32 %v341, %v412
    %v414 = vand.u32 %v413, 4294901760
    %v415 = vsub.f32 %v413, %v414
    %v416 = vand.u32 %v415, 4294901760
    %417 = vmatpush.msra.mxu0 %v416
    %v418 = vand.u32 %v340, 4294901760
    %v419 = vsub.f32 %v340, %v418
    %v420 = vand.u32 %v419, 4294901760
    %v421 = vsub.f32 %v419, %v420
    %v422 = vand.u32 %v421, 4294901760
    %423 = vmatpush.msra.mxu0 %v422
    %v424 = vand.u32 %v339, 4294901760
    %v425 = vsub.f32 %v339, %v424
    %v426 = vand.u32 %v425, 4294901760
    %v427 = vsub.f32 %v425, %v426
    %v428 = vand.u32 %v427, 4294901760
    %429 = vmatpush.msra.mxu0 %v428
    %v430 = vand.u32 %v338, 4294901760
    %v431 = vsub.f32 %v338, %v430
    %v432 = vand.u32 %v431, 4294901760
    %v433 = vsub.f32 %v431, %v432
    %v434 = vand.u32 %v433, 4294901760
    %435 = vmatpush.msra.mxu0 %v434
    %v436 = vand.u32 %v337, 4294901760
    %v437 = vsub.f32 %v337, %v436
    %v438 = vand.u32 %v437, 4294901760
    %v439 = vsub.f32 %v437, %v438
    %v440 = vand.u32 %v439, 4294901760
    %441 = vmatpush.msra.mxu0 %v440
    %v442 = vand.u32 %v336, 4294901760
    %v443 = vsub.f32 %v336, %v442
    %v444 = vand.u32 %v443, 4294901760
    %v445 = vsub.f32 %v443, %v444
    %v446 = vand.u32 %v445, 4294901760
    %447 = vmatpush.msra.mxu0 %v446
    %v448 = vand.u32 %v335, 4294901760
    %v449 = vsub.f32 %v335, %v448
    %v450 = vand.u32 %v449, 4294901760
    %v451 = vsub.f32 %v449, %v450
    %v452 = vand.u32 %v451, 4294901760
    %453 = vmatpush.msra.mxu0 %v452
    %v454 = vand.u32 %v334, 4294901760
    %v455 = vsub.f32 %v334, %v454
    %v456 = vand.u32 %v455, 4294901760
    %v457 = vsub.f32 %v455, %v456
    %v458 = vand.u32 %v457, 4294901760
    %459 = vmatpush.msra.mxu0 %v458
    %v460 = vand.u32 %v333, 4294901760
    %v461 = vsub.f32 %v333, %v460
    %v462 = vand.u32 %v461, 4294901760
    %v463 = vsub.f32 %v461, %v462
    %v464 = vand.u32 %v463, 4294901760
    %465 = vmatpush.msra.mxu0 %v464
    %v466 = vand.u32 %v332, 4294901760
    %v467 = vsub.f32 %v332, %v466
    %v468 = vand.u32 %v467, 4294901760
    %v469 = vsub.f32 %v467, %v468
    %v470 = vand.u32 %v469, 4294901760
    %471 = vmatpush.msra.mxu0 %v470
    %v472 = vand.u32 %v331, 4294901760
    %v473 = vsub.f32 %v331, %v472
    %v474 = vand.u32 %v473, 4294901760
    %v475 = vsub.f32 %v473, %v474
    %v476 = vand.u32 %v475, 4294901760
    %477 = vmatpush.msra.mxu0 %v476
    %v478 = vand.u32 %v330, 4294901760
    %v479 = vsub.f32 %v330, %v478
    %v480 = vand.u32 %v479, 4294901760
    %v481 = vsub.f32 %v479, %v480
    %v482 = vand.u32 %v481, 4294901760
    %483 = vmatpush.msra.mxu0 %v482
    %v484 = vand.u32 %v329, 4294901760
    %v485 = vsub.f32 %v329, %v484
    %v486 = vand.u32 %v485, 4294901760
    %v487 = vsub.f32 %v485, %v486
    %v488 = vand.u32 %v487, 4294901760
    %489 = vmatpush.msra.mxu0 %v488
    %v490 = vand.u32 %v327, 4294901760
    %491 = vmatmul.f32.gmra.mxu0 %v490
    %v492 = vpop.f32.mrf.mxu0
    %v493 = vadd.f32 %v384, %v492
    %v494 = vand.u32 %v328, 4294901760
    %495 = vmatmul.f32.gmra.mxu0 %v494
    %v496 = vpop.f32.mrf.mxu0
    %v497 = vadd.f32 %v392, %v496
    %498 = vdwg.mxu0
    %v499 = vand.u32 %v344, 4294901760
    %v500 = vsub.f32 %v344, %v499
    %501 = vmatpush.msra.mxu0 %v500
    %v502 = vand.u32 %v343, 4294901760
    %v503 = vsub.f32 %v343, %v502
    %504 = vmatpush.msra.mxu0 %v503
    %v505 = vand.u32 %v342, 4294901760
    %v506 = vsub.f32 %v342, %v505
    %507 = vmatpush.msra.mxu0 %v506
    %v508 = vand.u32 %v341, 4294901760
    %v509 = vsub.f32 %v341, %v508
    %510 = vmatpush.msra.mxu0 %v509
    %v511 = vand.u32 %v340, 4294901760
    %v512 = vsub.f32 %v340, %v511
    %513 = vmatpush.msra.mxu0 %v512
    %v514 = vand.u32 %v339, 4294901760
    %v515 = vsub.f32 %v339, %v514
    %516 = vmatpush.msra.mxu0 %v515
    %v517 = vand.u32 %v338, 4294901760
    %v518 = vsub.f32 %v338, %v517
    %519 = vmatpush.msra.mxu0 %v518
    %v520 = vand.u32 %v337, 4294901760
    %v521 = vsub.f32 %v337, %v520
    %522 = vmatpush.msra.mxu0 %v521
    %v523 = vand.u32 %v336, 4294901760
    %v524 = vsub.f32 %v336, %v523
    %525 = vmatpush.msra.mxu0 %v524
    %v526 = vand.u32 %v335, 4294901760
    %v527 = vsub.f32 %v335, %v526
    %528 = vmatpush.msra.mxu0 %v527
    %v529 = vand.u32 %v334, 4294901760
    %v530 = vsub.f32 %v334, %v529
    %531 = vmatpush.msra.mxu0 %v530
    %v532 = vand.u32 %v333, 4294901760
    %v533 = vsub.f32 %v333, %v532
    %534 = vmatpush.msra.mxu0 %v533
    %v535 = vand.u32 %v332, 4294901760
    %v536 = vsub.f32 %v332, %v535
    %537 = vmatpush.msra.mxu0 %v536
    %v538 = vand.u32 %v331, 4294901760
    %v539 = vsub.f32 %v331, %v538
    %540 = vmatpush.msra.mxu0 %v539
    %v541 = vand.u32 %v330, 4294901760
    %v542 = vsub.f32 %v330, %v541
    %543 = vmatpush.msra.mxu0 %v542
    %v544 = vand.u32 %v329, 4294901760
    %v545 = vsub.f32 %v329, %v544
    %546 = vmatpush.msra.mxu0 %v545
    %v547 = vand.u32 %v327, 4294901760
    %v548 = vsub.f32 %v327, %v547
    %549 = vmatmul.f32.gmra.mxu0 %v548
    %v550 = vpop.f32.mrf.mxu0
    %v551 = vadd.f32 %v493, %v550
    %v552 = vand.u32 %v328, 4294901760
    %v553 = vsub.f32 %v328, %v552
    %554 = vmatmul.f32.gmra.mxu0 %v553
    %v555 = vpop.f32.mrf.mxu0
    %v556 = vadd.f32 %v497, %v555
    %557 = vdwg.mxu0
    %v558 = vand.u32 %v344, 4294901760
    %559 = vmatpush.msra.mxu0 %v558
    %v560 = vand.u32 %v343, 4294901760
    %561 = vmatpush.msra.mxu0 %v560
    %v562 = vand.u32 %v342, 4294901760
    %563 = vmatpush.msra.mxu0 %v562
    %v564 = vand.u32 %v341, 4294901760
    %565 = vmatpush.msra.mxu0 %v564
    %v566 = vand.u32 %v340, 4294901760
    %567 = vmatpush.msra.mxu0 %v566
    %v568 = vand.u32 %v339, 4294901760
    %569 = vmatpush.msra.mxu0 %v568
    %v570 = vand.u32 %v338, 4294901760
    %571 = vmatpush.msra.mxu0 %v570
    %v572 = vand.u32 %v337, 4294901760
    %573 = vmatpush.msra.mxu0 %v572
    %v574 = vand.u32 %v336, 4294901760
    %575 = vmatpush.msra.mxu0 %v574
    %v576 = vand.u32 %v335, 4294901760
    %577 = vmatpush.msra.mxu0 %v576
    %v578 = vand.u32 %v334, 4294901760
    %579 = vmatpush.msra.mxu0 %v578
    %v580 = vand.u32 %v333, 4294901760
    %581 = vmatpush.msra.mxu0 %v580
    %v582 = vand.u32 %v332, 4294901760
    %583 = vmatpush.msra.mxu0 %v582
    %v584 = vand.u32 %v331, 4294901760
    %585 = vmatpush.msra.mxu0 %v584
    %v586 = vand.u32 %v330, 4294901760
    %587 = vmatpush.msra.mxu0 %v586
    %v588 = vand.u32 %v329, 4294901760
    %589 = vmatpush.msra.mxu0 %v588
    %v590 = vand.u32 %v327, 4294901760
    %v591 = vsub.f32 %v327, %v590
    %v592 = vand.u32 %v591, 4294901760
    %593 = vmatmul.f32.gmra.mxu0 %v592
    %v594 = vpop.f32.mrf.mxu0
    %v595 = vadd.f32 %v551, %v594
    %v596 = vand.u32 %v328, 4294901760
    %v597 = vsub.f32 %v328, %v596
    %v598 = vand.u32 %v597, 4294901760
    %599 = vmatmul.f32.gmra.mxu0 %v598
    %v600 = vpop.f32.mrf.mxu0
    %v601 = vadd.f32 %v556, %v600
    %602 = vdwg.mxu0
    %v603 = vand.u32 %v344, 4294901760
    %v604 = vsub.f32 %v344, %v603
    %v605 = vand.u32 %v604, 4294901760
    %606 = vmatpush.msra.mxu0 %v605
    %v607 = vand.u32 %v343, 4294901760
    %v608 = vsub.f32 %v343, %v607
    %v609 = vand.u32 %v608, 4294901760
    %610 = vmatpush.msra.mxu0 %v609
    %v611 = vand.u32 %v342, 4294901760
    %v612 = vsub.f32 %v342, %v611
    %v613 = vand.u32 %v612, 4294901760
    %614 = vmatpush.msra.mxu0 %v613
    %v615 = vand.u32 %v341, 4294901760
    %v616 = vsub.f32 %v341, %v615
    %v617 = vand.u32 %v616, 4294901760
    %618 = vmatpush.msra.mxu0 %v617
    %v619 = vand.u32 %v340, 4294901760
    %v620 = vsub.f32 %v340, %v619
    %v621 = vand.u32 %v620, 4294901760
    %622 = vmatpush.msra.mxu0 %v621
    %v623 = vand.u32 %v339, 4294901760
    %v624 = vsub.f32 %v339, %v623
    %v625 = vand.u32 %v624, 4294901760
    %626 = vmatpush.msra.mxu0 %v625
    %v627 = vand.u32 %v338, 4294901760
    %v628 = vsub.f32 %v338, %v627
    %v629 = vand.u32 %v628, 4294901760
    %630 = vmatpush.msra.mxu0 %v629
    %v631 = vand.u32 %v337, 4294901760
    %v632 = vsub.f32 %v337, %v631
    %v633 = vand.u32 %v632, 4294901760
    %634 = vmatpush.msra.mxu0 %v633
    %v635 = vand.u32 %v336, 4294901760
    %v636 = vsub.f32 %v336, %v635
    %v637 = vand.u32 %v636, 4294901760
    %638 = vmatpush.msra.mxu0 %v637
    %v639 = vand.u32 %v335, 4294901760
    %v640 = vsub.f32 %v335, %v639
    %v641 = vand.u32 %v640, 4294901760
    %642 = vmatpush.msra.mxu0 %v641
    %v643 = vand.u32 %v334, 4294901760
    %v644 = vsub.f32 %v334, %v643
    %v645 = vand.u32 %v644, 4294901760
    %646 = vmatpush.msra.mxu0 %v645
    %v647 = vand.u32 %v333, 4294901760
    %v648 = vsub.f32 %v333, %v647
    %v649 = vand.u32 %v648, 4294901760
    %650 = vmatpush.msra.mxu0 %v649
    %v651 = vand.u32 %v332, 4294901760
    %v652 = vsub.f32 %v332, %v651
    %v653 = vand.u32 %v652, 4294901760
    %654 = vmatpush.msra.mxu0 %v653
    %v655 = vand.u32 %v331, 4294901760
    %v656 = vsub.f32 %v331, %v655
    %v657 = vand.u32 %v656, 4294901760
    %658 = vmatpush.msra.mxu0 %v657
    %v659 = vand.u32 %v330, 4294901760
    %v660 = vsub.f32 %v330, %v659
    %v661 = vand.u32 %v660, 4294901760
    %662 = vmatpush.msra.mxu0 %v661
    %v663 = vand.u32 %v329, 4294901760
    %v664 = vsub.f32 %v329, %v663
    %v665 = vand.u32 %v664, 4294901760
    %666 = vmatpush.msra.mxu0 %v665
    %v667 = vand.u32 %v327, 4294901760
    %668 = vmatmul.f32.gmra.mxu0 %v667
    %v669 = vpop.f32.mrf.mxu0
    %v670 = vadd.f32 %v595, %v669
    %v671 = vand.u32 %v328, 4294901760
    %672 = vmatmul.f32.gmra.mxu0 %v671
    %v673 = vpop.f32.mrf.mxu0
    %v674 = vadd.f32 %v601, %v673
    %675 = vdwg.mxu0
    %v676 = vand.u32 %v344, 4294901760
    %677 = vmatpush.msra.mxu0 %v676
    %v678 = vand.u32 %v343, 4294901760
    %679 = vmatpush.msra.mxu0 %v678
    %v680 = vand.u32 %v342, 4294901760
    %681 = vmatpush.msra.mxu0 %v680
    %v682 = vand.u32 %v341, 4294901760
    %683 = vmatpush.msra.mxu0 %v682
    %v684 = vand.u32 %v340, 4294901760
    %685 = vmatpush.msra.mxu0 %v684
    %v686 = vand.u32 %v339, 4294901760
    %687 = vmatpush.msra.mxu0 %v686
    %v688 = vand.u32 %v338, 4294901760
    %689 = vmatpush.msra.mxu0 %v688
    %v690 = vand.u32 %v337, 4294901760
    %691 = vmatpush.msra.mxu0 %v690
    %v692 = vand.u32 %v336, 4294901760
    %693 = vmatpush.msra.mxu0 %v692
    %v694 = vand.u32 %v335, 4294901760
    %695 = vmatpush.msra.mxu0 %v694
    %v696 = vand.u32 %v334, 4294901760
    %697 = vmatpush.msra.mxu0 %v696
    %v698 = vand.u32 %v333, 4294901760
    %699 = vmatpush.msra.mxu0 %v698
    %v700 = vand.u32 %v332, 4294901760
    %701 = vmatpush.msra.mxu0 %v700
    %v702 = vand.u32 %v331, 4294901760
    %703 = vmatpush.msra.mxu0 %v702
    %v704 = vand.u32 %v330, 4294901760
    %705 = vmatpush.msra.mxu0 %v704
    %v706 = vand.u32 %v329, 4294901760
    %707 = vmatpush.msra.mxu0 %v706
    %v708 = vand.u32 %v327, 4294901760
    %709 = vmatmul.f32.gmra.mxu0 %v708
    %v710 = vpop.f32.mrf.mxu0
    %v711 = vadd.f32 %v670, %v710
    %v712 = vand.u32 %v328, 4294901760
    %713 = vmatmul.f32.gmra.mxu0 %v712
    %v714 = vpop.f32.mrf.mxu0
    %v715 = vadd.f32 %v674, %v714
    %716 = vdwg.mxu0
    %vm717 = vcmask 261120
    %v719 = vsel %vm717, %v321, 0
    %v722 = vsel %vm717, %v322, 0
    %724 = vmatpush.msra.mxu0 0.0
    %725 = vmatpush.msra.mxu0 0.0
    %726 = vmatpush.msra.mxu0 0.0
    %727 = vmatpush.msra.mxu0 0.0
    %728 = vmatpush.msra.mxu0 0.0
    %729 = vmatpush.msra.mxu0 0.0
    %730 = vmatpush.msra.mxu0 0.0
    %731 = vmatpush.msra.mxu0 0.0
    %732 = vmatpush.msra.mxu0 0.0
    %733 = vmatpush.msra.mxu0 0.0
    %734 = vmatpush.msra.mxu0 0.0
    %735 = vmatpush.msra.mxu0 0.0
    %v736 = vand.u32 %v326, 4294901760
    %737 = vmatpush.msra.mxu0 %v736
    %v738 = vand.u32 %v325, 4294901760
    %739 = vmatpush.msra.mxu0 %v738
    %v740 = vand.u32 %v324, 4294901760
    %741 = vmatpush.msra.mxu0 %v740
    %v742 = vand.u32 %v323, 4294901760
    %743 = vmatpush.msra.mxu0 %v742
    %v744 = vand.u32 %v719, 4294901760
    %v745 = vsub.f32 %v719, %v744
    %v746 = vand.u32 %v745, 4294901760
    %v747 = vsub.f32 %v745, %v746
    %v748 = vand.u32 %v747, 4294901760
    %749 = vmatmul.f32.gmra.mxu0 %v748
    %v750 = vpop.f32.mrf.mxu0
    %v751 = vadd.f32 %v711, %v750
    %v752 = vand.u32 %v722, 4294901760
    %v753 = vsub.f32 %v722, %v752
    %v754 = vand.u32 %v753, 4294901760
    %v755 = vsub.f32 %v753, %v754
    %v756 = vand.u32 %v755, 4294901760
    %757 = vmatmul.f32.gmra.mxu0 %v756
    %v758 = vpop.f32.mrf.mxu0
    %v759 = vadd.f32 %v715, %v758
    %760 = vdwg.mxu0
    %761 = vmatpush.msra.mxu0 0.0
    %762 = vmatpush.msra.mxu0 0.0
    %763 = vmatpush.msra.mxu0 0.0
    %764 = vmatpush.msra.mxu0 0.0
    %765 = vmatpush.msra.mxu0 0.0
    %766 = vmatpush.msra.mxu0 0.0
    %767 = vmatpush.msra.mxu0 0.0
    %768 = vmatpush.msra.mxu0 0.0
    %769 = vmatpush.msra.mxu0 0.0
    %770 = vmatpush.msra.mxu0 0.0
    %771 = vmatpush.msra.mxu0 0.0
    %772 = vmatpush.msra.mxu0 0.0
    %v773 = vand.u32 %v326, 4294901760
    %v774 = vsub.f32 %v326, %v773
    %v775 = vand.u32 %v774, 4294901760
    %v776 = vsub.f32 %v774, %v775
    %v777 = vand.u32 %v776, 4294901760
    %778 = vmatpush.msra.mxu0 %v777
    %v779 = vand.u32 %v325, 4294901760
    %v780 = vsub.f32 %v325, %v779
    %v781 = vand.u32 %v780, 4294901760
    %v782 = vsub.f32 %v780, %v781
    %v783 = vand.u32 %v782, 4294901760
    %784 = vmatpush.msra.mxu0 %v783
    %v785 = vand.u32 %v324, 4294901760
    %v786 = vsub.f32 %v324, %v785
    %v787 = vand.u32 %v786, 4294901760
    %v788 = vsub.f32 %v786, %v787
    %v789 = vand.u32 %v788, 4294901760
    %790 = vmatpush.msra.mxu0 %v789
    %v791 = vand.u32 %v323, 4294901760
    %v792 = vsub.f32 %v323, %v791
    %v793 = vand.u32 %v792, 4294901760
    %v794 = vsub.f32 %v792, %v793
    %v795 = vand.u32 %v794, 4294901760
    %796 = vmatpush.msra.mxu0 %v795
    %v797 = vand.u32 %v719, 4294901760
    %798 = vmatmul.f32.gmra.mxu0 %v797
    %v799 = vpop.f32.mrf.mxu0
    %v800 = vadd.f32 %v751, %v799
    %v801 = vand.u32 %v722, 4294901760
    %802 = vmatmul.f32.gmra.mxu0 %v801
    %v803 = vpop.f32.mrf.mxu0
    %v804 = vadd.f32 %v759, %v803
    %805 = vdwg.mxu0
    %806 = vmatpush.msra.mxu0 0.0
    %807 = vmatpush.msra.mxu0 0.0
    %808 = vmatpush.msra.mxu0 0.0
    %809 = vmatpush.msra.mxu0 0.0
    %810 = vmatpush.msra.mxu0 0.0
    %811 = vmatpush.msra.mxu0 0.0
    %812 = vmatpush.msra.mxu0 0.0
    %813 = vmatpush.msra.mxu0 0.0
    %814 = vmatpush.msra.mxu0 0.0
    %815 = vmatpush.msra.mxu0 0.0
    %816 = vmatpush.msra.mxu0 0.0
    %817 = vmatpush.msra.mxu0 0.0
    %v818 = vand.u32 %v326, 4294901760
    %v819 = vsub.f32 %v326, %v818
    %820 = vmatpush.msra.mxu0 %v819
    %v821 = vand.u32 %v325, 4294901760
    %v822 = vsub.f32 %v325, %v821
    %823 = vmatpush.msra.mxu0 %v822
    %v824 = vand.u32 %v324, 4294901760
    %v825 = vsub.f32 %v324, %v824
    %826 = vmatpush.msra.mxu0 %v825
    %v827 = vand.u32 %v323, 4294901760
    %v828 = vsub.f32 %v323, %v827
    %829 = vmatpush.msra.mxu0 %v828
    %v830 = vand.u32 %v719, 4294901760
    %v831 = vsub.f32 %v719, %v830
    %832 = vmatmul.f32.gmra.mxu0 %v831
    %v833 = vpop.f32.mrf.mxu0
    %v834 = vadd.f32 %v800, %v833
    %v835 = vand.u32 %v722, 4294901760
    %v836 = vsub.f32 %v722, %v835
    %837 = vmatmul.f32.gmra.mxu0 %v836
    %v838 = vpop.f32.mrf.mxu0
    %v839 = vadd.f32 %v804, %v838
    %840 = vdwg.mxu0
    %841 = vmatpush.msra.mxu0 0.0
    %842 = vmatpush.msra.mxu0 0.0
    %843 = vmatpush.msra.mxu0 0.0
    %844 = vmatpush.msra.mxu0 0.0
    %845 = vmatpush.msra.mxu0 0.0
    %846 = vmatpush.msra.mxu0 0.0
    %847 = vmatpush.msra.mxu0 0.0
    %848 = vmatpush.msra.mxu0 0.0
    %849 = vmatpush.msra.mxu0 0.0
    %850 = vmatpush.msra.mxu0 0.0
    %851 = vmatpush.msra.mxu0 0.0
    %852 = vmatpush.msra.mxu0 0.0
    %v853 = vand.u32 %v326, 4294901760
    %854 = vmatpush.msra.mxu0 %v853
    %v855 = vand.u32 %v325, 4294901760
    %856 = vmatpush.msra.mxu0 %v855
    %v857 = vand.u32 %v324, 4294901760
    %858 = vmatpush.msra.mxu0 %v857
    %v859 = vand.u32 %v323, 4294901760
    %860 = vmatpush.msra.mxu0 %v859
    %v861 = vand.u32 %v719, 4294901760
    %v862 = vsub.f32 %v719, %v861
    %v863 = vand.u32 %v862, 4294901760
    %864 = vmatmul.f32.gmra.mxu0 %v863
    %v865 = vpop.f32.mrf.mxu0
    %v866 = vadd.f32 %v834, %v865
    %v867 = vand.u32 %v722, 4294901760
    %v868 = vsub.f32 %v722, %v867
    %v869 = vand.u32 %v868, 4294901760
    %870 = vmatmul.f32.gmra.mxu0 %v869
    %v871 = vpop.f32.mrf.mxu0
    %v872 = vadd.f32 %v839, %v871
    %873 = vdwg.mxu0
    %874 = vmatpush.msra.mxu0 0.0
    %875 = vmatpush.msra.mxu0 0.0
    %876 = vmatpush.msra.mxu0 0.0
    %877 = vmatpush.msra.mxu0 0.0
    %878 = vmatpush.msra.mxu0 0.0
    %879 = vmatpush.msra.mxu0 0.0
    %880 = vmatpush.msra.mxu0 0.0
    %881 = vmatpush.msra.mxu0 0.0
    %882 = vmatpush.msra.mxu0 0.0
    %883 = vmatpush.msra.mxu0 0.0
    %884 = vmatpush.msra.mxu0 0.0
    %885 = vmatpush.msra.mxu0 0.0
    %v886 = vand.u32 %v326, 4294901760
    %v887 = vsub.f32 %v326, %v886
    %v888 = vand.u32 %v887, 4294901760
    %889 = vmatpush.msra.mxu0 %v888
    %v890 = vand.u32 %v325, 4294901760
    %v891 = vsub.f32 %v325, %v890
    %v892 = vand.u32 %v891, 4294901760
    %893 = vmatpush.msra.mxu0 %v892
    %v894 = vand.u32 %v324, 4294901760
    %v895 = vsub.f32 %v324, %v894
    %v896 = vand.u32 %v895, 4294901760
    %897 = vmatpush.msra.mxu0 %v896
    %v898 = vand.u32 %v323, 4294901760
    %v899 = vsub.f32 %v323, %v898
    %v900 = vand.u32 %v899, 4294901760
    %901 = vmatpush.msra.mxu0 %v900
    %v902 = vand.u32 %v719, 4294901760
    %903 = vmatmul.f32.gmra.mxu0 %v902
    %v904 = vpop.f32.mrf.mxu0
    %v905 = vadd.f32 %v866, %v904
    %v906 = vand.u32 %v722, 4294901760
    %907 = vmatmul.f32.gmra.mxu0 %v906
    %v908 = vpop.f32.mrf.mxu0
    %v909 = vadd.f32 %v872, %v908
    %910 = vdwg.mxu0
    %911 = vmatpush.msra.mxu0 0.0
    %912 = vmatpush.msra.mxu0 0.0
    %913 = vmatpush.msra.mxu0 0.0
    %914 = vmatpush.msra.mxu0 0.0
    %915 = vmatpush.msra.mxu0 0.0
    %916 = vmatpush.msra.mxu0 0.0
    %917 = vmatpush.msra.mxu0 0.0
    %918 = vmatpush.msra.mxu0 0.0
    %919 = vmatpush.msra.mxu0 0.0
    %920 = vmatpush.msra.mxu0 0.0
    %921 = vmatpush.msra.mxu0 0.0
    %922 = vmatpush.msra.mxu0 0.0
    %v923 = vand.u32 %v326, 4294901760
    %924 = vmatpush.msra.mxu0 %v923
    %v925 = vand.u32 %v325, 4294901760
    %926 = vmatpush.msra.mxu0 %v925
    %v927 = vand.u32 %v324, 4294901760
    %928 = vmatpush.msra.mxu0 %v927
    %v929 = vand.u32 %v323, 4294901760
    %930 = vmatpush.msra.mxu0 %v929
    %v931 = vand.u32 %v719, 4294901760
    %932 = vmatmul.f32.gmra.mxu0 %v931
    %v933 = vpop.f32.mrf.mxu0
    %v934 = vadd.f32 %v905, %v933
    %v935 = vand.u32 %v722, 4294901760
    %936 = vmatmul.f32.gmra.mxu0 %v935
    %v937 = vpop.f32.mrf.mxu0
    %v938 = vadd.f32 %v909, %v937
    %939 = vdwg.mxu0
    %v940 = vld [vmem:[%s2] sm:$0x1]
    %v942 = vperm.slane %v940, 0
    %v944 = vadd.f32 %v934, %v942
    %v945 = vadd.f32 %v938, %v942
    %946 = vst [vmem:[#allocation11] sm:$0xff] %v944
    %947 = vst [vmem:[#allocation11 + $0x8] sm:$0xff] %v945
    // Predicated region
    $region42: #{tpu_custom_call.1} parent=1 // pred_check
      _
    $region43: #{tpu_custom_call.1} parent=1 // pred_check_branch
      %949 = sbr.rel (0) target = $region45
    $region44: #{tpu_custom_call.1} parent=1 // pred_region
      %951 = vsyncadd [#allocation5], 0
      %s952 = sshll.u32 [#allocation11], 4
      %s953 = int_to_ptr.vmem [resolvable:$true] %s952
      %s954 = sshll.u32 %s5, 4
      %s955 = int_to_ptr.hbm [resolvable:$true] %s954
      %960 = dma.vmem_to_hbm [thread:$0]  %s953, 256, %s955, [#allocation5], 128, 128, 8
    $region45: #{tpu_custom_call.1} parent=1 // pred_fallthru
      _
    // Predicated region
    $region46: #{tpu_custom_call.1} parent=1 // pred_check
      _
    $region47: #{tpu_custom_call.1} parent=1 // pred_check_branch
      %962 = sbr.rel (0) target = $region49
    $region48: #{tpu_custom_call.1} parent=1 // pred_region
      %964 = dma.done [#allocation5], 256
    $region49: #{tpu_custom_call.1} parent=1 // pred_fallthru
      _
    %965 = vsyncpa [#allocation4], 1
    %966 = vsyncpa [#allocation7], 1
    %967 = vsyncpa [#allocation10], 1
    %968 = vsyncpa [#allocation5], 1

// kernel: tpu_custom_call.1
$region0: #{tpu_custom_call.1}
  #allocation0 [shape = 'u32[]', space=smem, size = 0x4, offset = 0x4, fixed_abs, tag = 'smem constant byte address 0x4 - core index']
  #allocation1 [shape = 'u32[72,128]{1,0:T(1,128)}', space=vmem, size = 0x9000, scoped, tag = 'internal scratch']
  #allocation2 [shape = 'f32[16,128]{1,0:T(8,128)}', space=vmem, size = 0x2000, scoped, tag = 'scratch operand']
  %s0 = inlined_call_operand.hbm [shape: f32[16,32], index: 0, kind: input, shape index: {}]
  %s1 = inlined_call_operand.hbm [shape: f32[32,128], index: 1, kind: input, shape index: {}]
  %s2 = inlined_call_operand.vmem [shape: f32[1,128], index: 2, kind: input, shape index: {}]
  %s3 = inlined_call_operand.hbm [shape: f32[32,128], index: 3, kind: input, shape index: {}]
  %s4 = inlined_call_operand.hbm [shape: f32[128,128], index: 4, kind: input, shape index: {}]
  %s5 = inlined_call_operand.hbm [shape: f32[16,128], index: 5, kind: output, shape index: {}]
  %s6 = sld [smem:[#allocation0]]
  $region50: #{tpu_custom_call.1} parent=0
    _
  %s8 = ssub.s32 1, %s6
  %s9 = scalar_select 0, %s8, %s6
  $region1: #{tpu_custom_call.1} parent=0
    #allocation3 [shape = 'u8[8192]{0}', space=vmem, size = 0x2000, scoped, tag = 'input window, operand 0, single buffered']
    #allocation4 [shape = 's32[1]{0}', space=sflag, size = 0x4, scoped, tag = 'scoped memory for tpu_custom_call.1']
    #allocation5 [shape = 's32[1]{0}', space=sflag, size = 0x4, scoped, tag = 'scoped memory for tpu_custom_call.1']
    #allocation6 [shape = 'u8[16384]{0}', space=vmem, size = 0x4000, scoped, tag = 'input window, operand 1, single buffered']
    #allocation7 [shape = 's32[1]{0}', space=sflag, size = 0x4, scoped, tag = 'scoped memory for tpu_custom_call.1']
    #allocation8 [shape = 'u8[16384]{0}', space=vmem, size = 0x4000, scoped, tag = 'input window, operand 3, single buffered']
    #allocation9 [shape = 'u8[65536]{0}', space=vmem, size = 0x10000, scoped, tag = 'input window, operand 4, single buffered']
    #allocation10 [shape = 's32[1]{0}', space=sflag, size = 0x4, scoped, tag = 'scoped memory for tpu_custom_call.1']
    #allocation11 [shape = 'u8[8192]{0}', space=vmem, size = 0x2000, scoped, tag = 'output window, operand 0, single buffered']
    %10 = vsyncpa [#allocation4], 0
    %11 = vsyncpa [#allocation7], 0
    %12 = vsyncpa [#allocation10], 0
    %13 = vsyncpa [#allocation5], 0
    // Predicated region
    $region2: #{tpu_custom_call.1} parent=1 // pred_check
      _
    $region3: #{tpu_custom_call.1} parent=1 // pred_check_branch
      %15 = sbr.rel (0) target = $region5
    $region4: #{tpu_custom_call.1} parent=1 // pred_region
      %17 = vsyncadd [#allocation4], 0
      %s18 = sshll.u32 %s0, 4
      %s19 = int_to_ptr.hbm [resolvable:$true] %s18
      %s20 = sshll.u32 [#allocation3], 4
      %s21 = int_to_ptr.vmem [resolvable:$true] %s20
      %26 = dma.hbm_to_vmem [thread:$0]  %s19, 256, %s21, [#allocation4], 128, 128, 8
    $region5: #{tpu_custom_call.1} parent=1 // pred_fallthru
      _
    // Predicated region
    $region6: #{tpu_custom_call.1} parent=1 // pred_check
      _
    $region7: #{tpu_custom_call.1} parent=1 // pred_check_branch
      %28 = sbr.rel (0) target = $region9
    $region8: #{tpu_custom_call.1} parent=1 // pred_region
      %30 = vsyncadd [#allocation7], 0
      %s31 = sshll.u32 %s1, 4
      %s32 = int_to_ptr.hbm [resolvable:$true] %s31
      %s33 = sshll.u32 [#allocation6], 4
      %s34 = int_to_ptr.vmem [resolvable:$true] %s33
      %39 = dma.hbm_to_vmem [thread:$0]  %s32, 512, %s34, [#allocation7], 128, 128, 8
    $region9: #{tpu_custom_call.1} parent=1 // pred_fallthru
      _
    // Predicated region
    $region10: #{tpu_custom_call.1} parent=1 // pred_check
      _
    $region11: #{tpu_custom_call.1} parent=1 // pred_check_branch
      %41 = sbr.rel (0) target = $region13
    $region12: #{tpu_custom_call.1} parent=1 // pred_region
      _
    $region13: #{tpu_custom_call.1} parent=1 // pred_fallthru
      _
    // Predicated region
    $region14: #{tpu_custom_call.1} parent=1 // pred_check
      _
    $region15: #{tpu_custom_call.1} parent=1 // pred_check_branch
      %43 = sbr.rel (0) target = $region17
    $region16: #{tpu_custom_call.1} parent=1 // pred_region
      %45 = vsyncadd [#allocation7], 0
      %s46 = sshll.u32 %s3, 4
      %s47 = int_to_ptr.hbm [resolvable:$true] %s46
      %s48 = sshll.u32 [#allocation8], 4
      %s49 = int_to_ptr.vmem [resolvable:$true] %s48
      %54 = dma.hbm_to_vmem [thread:$0]  %s47, 512, %s49, [#allocation7], 128, 128, 8
    $region17: #{tpu_custom_call.1} parent=1 // pred_fallthru
      _
    // Predicated region
    $region18: #{tpu_custom_call.1} parent=1 // pred_check
      _
    $region19: #{tpu_custom_call.1} parent=1 // pred_check_branch
      %56 = sbr.rel (0) target = $region21
    $region20: #{tpu_custom_call.1} parent=1 // pred_region
      %58 = vsyncadd [#allocation10], 0
      %s59 = sshll.u32 %s4, 4
      %s60 = int_to_ptr.hbm [resolvable:$true] %s59
      %s61 = sshll.u32 [#allocation9], 4
      %s62 = int_to_ptr.vmem [resolvable:$true] %s61
      %67 = dma.hbm_to_vmem [thread:$0]  %s60, 2048, %s62, [#allocation10], 128, 128, 8
    $region21: #{tpu_custom_call.1} parent=1 // pred_fallthru
      _
    // Predicated region
    $region22: #{tpu_custom_call.1} parent=1 // pred_check
      _
    $region23: #{tpu_custom_call.1} parent=1 // pred_check_branch
      %69 = sbr.rel (0) target = $region25
    $region24: #{tpu_custom_call.1} parent=1 // pred_region
      %71 = dma.done [#allocation4], 256
    $region25: #{tpu_custom_call.1} parent=1 // pred_fallthru
      _
    // Predicated region
    $region26: #{tpu_custom_call.1} parent=1 // pred_check
      _
    $region27: #{tpu_custom_call.1} parent=1 // pred_check_branch
      %73 = sbr.rel (0) target = $region29
    $region28: #{tpu_custom_call.1} parent=1 // pred_region
      %75 = dma.done [#allocation7], 512
    $region29: #{tpu_custom_call.1} parent=1 // pred_fallthru
      _
    // Predicated region
    $region30: #{tpu_custom_call.1} parent=1 // pred_check
      _
    $region31: #{tpu_custom_call.1} parent=1 // pred_check_branch
      %77 = sbr.rel (0) target = $region33
    $region32: #{tpu_custom_call.1} parent=1 // pred_region
      %79 = dma.done [#allocation7], 512
    $region33: #{tpu_custom_call.1} parent=1 // pred_fallthru
      _
    // Predicated region
    $region34: #{tpu_custom_call.1} parent=1 // pred_check
      _
    $region35: #{tpu_custom_call.1} parent=1 // pred_check_branch
      %81 = sbr.rel (0) target = $region37
    $region36: #{tpu_custom_call.1} parent=1 // pred_region
      %83 = dma.done [#allocation10], 2048
    $region37: #{tpu_custom_call.1} parent=1 // pred_fallthru
      _
    %p84 = scmp.eq.s32.totalorder 0, 0
    // Predicated region
    $region38: #{tpu_custom_call.1} parent=1 // pred_check
      %p85 = pneg %p84
    $region39: #{tpu_custom_call.1} parent=1 // pred_check_branch
      %87 = sbr.rel (%p85) target = $region41
    $region40: #{tpu_custom_call.1} parent=1 // pred_region
      %v88 = vld [vmem:[#allocation3] sm:$0xff]
      %v89 = vld [vmem:[#allocation3 + $0x8] sm:$0xff]
      %v90 = vld [vmem:[#allocation8] sm:$0xff]
      %v91 = vld [vmem:[#allocation8 + $0x8] sm:$0xff]
      %v92 = vld [vmem:[#allocation8 + $0x10] sm:$0xff]
      %v93 = vld [vmem:[#allocation8 + $0x18] sm:$0xff]
      %vm94 = vcmask 261120
      %v96 = vsel %vm94, %v88, 0
      %v99 = vsel %vm94, %v89, 0
      %101 = vmatpush.msra.mxu0 0.0
      %102 = vmatpush.msra.mxu0 0.0
      %103 = vmatpush.msra.mxu0 0.0
      %104 = vmatpush.msra.mxu0 0.0
      %105 = vmatpush.msra.mxu0 0.0
      %106 = vmatpush.msra.mxu0 0.0
      %107 = vmatpush.msra.mxu0 0.0
      %108 = vmatpush.msra.mxu0 0.0
      %109 = vmatpush.msra.mxu0 0.0
      %110 = vmatpush.msra.mxu0 0.0
      %111 = vmatpush.msra.mxu0 0.0
      %112 = vmatpush.msra.mxu0 0.0
      %v113 = vand.u32 %v93, 4294901760
      %114 = vmatpush.msra.mxu0 %v113
      %v115 = vand.u32 %v92, 4294901760
      %116 = vmatpush.msra.mxu0 %v115
      %v117 = vand.u32 %v91, 4294901760
      %118 = vmatpush.msra.mxu0 %v117
      %v119 = vand.u32 %v90, 4294901760
      %120 = vmatpush.msra.mxu0 %v119
      %v121 = vand.u32 %v96, 4294901760
      %v122 = vsub.f32 %v96, %v121
      %v123 = vand.u32 %v122, 4294901760
      %v124 = vsub.f32 %v122, %v123
      %v125 = vand.u32 %v124, 4294901760
      %126 = vmatmul.f32.gmra.mxu0 %v125
      %v127 = vpop.f32.mrf.mxu0
      %v128 = vadd.f32 0.0, %v127
      %v129 = vand.u32 %v99, 4294901760
      %v130 = vsub.f32 %v99, %v129
      %v131 = vand.u32 %v130, 4294901760
      %v132 = vsub.f32 %v130, %v131
      %v133 = vand.u32 %v132, 4294901760
      %134 = vmatmul.f32.gmra.mxu0 %v133
      %v135 = vpop.f32.mrf.mxu0
      %v136 = vadd.f32 0.0, %v135
      %137 = vdwg.mxu0
      %138 = vmatpush.msra.mxu0 0.0
      %139 = vmatpush.msra.mxu0 0.0
      %140 = vmatpush.msra.mxu0 0.0
      %141 = vmatpush.msra.mxu0 0.0
      %142 = vmatpush.msra.mxu0 0.0
      %143 = vmatpush.msra.mxu0 0.0
      %144 = vmatpush.msra.mxu0 0.0
      %145 = vmatpush.msra.mxu0 0.0
      %146 = vmatpush.msra.mxu0 0.0
      %147 = vmatpush.msra.mxu0 0.0
      %148 = vmatpush.msra.mxu0 0.0
      %149 = vmatpush.msra.mxu0 0.0
      %v150 = vand.u32 %v93, 4294901760
      %v151 = vsub.f32 %v93, %v150
      %v152 = vand.u32 %v151, 4294901760
      %v153 = vsub.f32 %v151, %v152
      %v154 = vand.u32 %v153, 4294901760
      %155 = vmatpush.msra.mxu0 %v154
      %v156 = vand.u32 %v92, 4294901760
      %v157 = vsub.f32 %v92, %v156
      %v158 = vand.u32 %v157, 4294901760
      %v159 = vsub.f32 %v157, %v158
      %v160 = vand.u32 %v159, 4294901760
      %161 = vmatpush.msra.mxu0 %v160
      %v162 = vand.u32 %v91, 4294901760
      %v163 = vsub.f32 %v91, %v162
      %v164 = vand.u32 %v163, 4294901760
      %v165 = vsub.f32 %v163, %v164
      %v166 = vand.u32 %v165, 4294901760
      %167 = vmatpush.msra.mxu0 %v166
      %v168 = vand.u32 %v90, 4294901760
      %v169 = vsub.f32 %v90, %v168
      %v170 = vand.u32 %v169, 4294901760
      %v171 = vsub.f32 %v169, %v170
      %v172 = vand.u32 %v171, 4294901760
      %173 = vmatpush.msra.mxu0 %v172
      %v174 = vand.u32 %v96, 4294901760
      %175 = vmatmul.f32.gmra.mxu0 %v174
      %v176 = vpop.f32.mrf.mxu0
      %v177 = vadd.f32 %v128, %v176
      %v178 = vand.u32 %v99, 4294901760
      %179 = vmatmul.f32.gmra.mxu0 %v178
      %v180 = vpop.f32.mrf.mxu0
      %v181 = vadd.f32 %v136, %v180
      %182 = vdwg.mxu0
      %183 = vmatpush.msra.mxu0 0.0
      %184 = vmatpush.msra.mxu0 0.0
      %185 = vmatpush.msra.mxu0 0.0
      %186 = vmatpush.msra.mxu0 0.0
      %187 = vmatpush.msra.mxu0 0.0
      %188 = vmatpush.msra.mxu0 0.0
      %189 = vmatpush.msra.mxu0 0.0
      %190 = vmatpush.msra.mxu0 0.0
      %191 = vmatpush.msra.mxu0 0.0
      %192 = vmatpush.msra.mxu0 0.0
      %193 = vmatpush.msra.mxu0 0.0
      %194 = vmatpush.msra.mxu0 0.0
      %v195 = vand.u32 %v93, 4294901760
      %v196 = vsub.f32 %v93, %v195
      %197 = vmatpush.msra.mxu0 %v196
      %v198 = vand.u32 %v92, 4294901760
      %v199 = vsub.f32 %v92, %v198
      %200 = vmatpush.msra.mxu0 %v199
      %v201 = vand.u32 %v91, 4294901760
      %v202 = vsub.f32 %v91, %v201
      %203 = vmatpush.msra.mxu0 %v202
      %v204 = vand.u32 %v90, 4294901760
      %v205 = vsub.f32 %v90, %v204
      %206 = vmatpush.msra.mxu0 %v205
      %v207 = vand.u32 %v96, 4294901760
      %v208 = vsub.f32 %v96, %v207
      %209 = vmatmul.f32.gmra.mxu0 %v208
      %v210 = vpop.f32.mrf.mxu0
      %v211 = vadd.f32 %v177, %v210
      %v212 = vand.u32 %v99, 4294901760
      %v213 = vsub.f32 %v99, %v212
      %214 = vmatmul.f32.gmra.mxu0 %v213
      %v215 = vpop.f32.mrf.mxu0
      %v216 = vadd.f32 %v181, %v215
      %217 = vdwg.mxu0
      %218 = vmatpush.msra.mxu0 0.0
      %219 = vmatpush.msra.mxu0 0.0
      %220 = vmatpush.msra.mxu0 0.0
      %221 = vmatpush.msra.mxu0 0.0
      %222 = vmatpush.msra.mxu0 0.0
      %223 = vmatpush.msra.mxu0 0.0
      %224 = vmatpush.msra.mxu0 0.0
      %225 = vmatpush.msra.mxu0 0.0
      %226 = vmatpush.msra.mxu0 0.0
      %227 = vmatpush.msra.mxu0 0.0
      %228 = vmatpush.msra.mxu0 0.0
      %229 = vmatpush.msra.mxu0 0.0
      %v230 = vand.u32 %v93, 4294901760
      %231 = vmatpush.msra.mxu0 %v230
      %v232 = vand.u32 %v92, 4294901760
      %233 = vmatpush.msra.mxu0 %v232
      %v234 = vand.u32 %v91, 4294901760
      %235 = vmatpush.msra.mxu0 %v234
      %v236 = vand.u32 %v90, 4294901760
      %237 = vmatpush.msra.mxu0 %v236
      %v238 = vand.u32 %v96, 4294901760
      %v239 = vsub.f32 %v96, %v238
      %v240 = vand.u32 %v239, 4294901760
      %241 = vmatmul.f32.gmra.mxu0 %v240
      %v242 = vpop.f32.mrf.mxu0
      %v243 = vadd.f32 %v211, %v242
      %v244 = vand.u32 %v99, 4294901760
      %v245 = vsub.f32 %v99, %v244
      %v246 = vand.u32 %v245, 4294901760
      %247 = vmatmul.f32.gmra.mxu0 %v246
      %v248 = vpop.f32.mrf.mxu0
      %v249 = vadd.f32 %v216, %v248
      %250 = vdwg.mxu0
      %251 = vmatpush.msra.mxu0 0.0
      %252 = vmatpush.msra.mxu0 0.0
      %253 = vmatpush.msra.mxu0 0.0
      %254 = vmatpush.msra.mxu0 0.0
      %255 = vmatpush.msra.mxu0 0.0
      %256 = vmatpush.msra.mxu0 0.0
      %257 = vmatpush.msra.mxu0 0.0
      %258 = vmatpush.msra.mxu0 0.0
      %259 = vmatpush.msra.mxu0 0.0
      %260 = vmatpush.msra.mxu0 0.0
      %261 = vmatpush.msra.mxu0 0.0
      %262 = vmatpush.msra.mxu0 0.0
      %v263 = vand.u32 %v93, 4294901760
      %v264 = vsub.f32 %v93, %v263
      %v265 = vand.u32 %v264, 4294901760
      %266 = vmatpush.msra.mxu0 %v265
      %v267 = vand.u32 %v92, 4294901760
      %v268 = vsub.f32 %v92, %v267
      %v269 = vand.u32 %v268, 4294901760
      %270 = vmatpush.msra.mxu0 %v269
      %v271 = vand.u32 %v91, 4294901760
      %v272 = vsub.f32 %v91, %v271
      %v273 = vand.u32 %v272, 4294901760
      %274 = vmatpush.msra.mxu0 %v273
      %v275 = vand.u32 %v90, 4294901760
      %v276 = vsub.f32 %v90, %v275
      %v277 = vand.u32 %v276, 4294901760
      %278 = vmatpush.msra.mxu0 %v277
      %v279 = vand.u32 %v96, 4294901760
      %280 = vmatmul.f32.gmra.mxu0 %v279
      %v281 = vpop.f32.mrf.mxu0
      %v282 = vadd.f32 %v243, %v281
      %v283 = vand.u32 %v99, 4294901760
      %284 = vmatmul.f32.gmra.mxu0 %v283
      %v285 = vpop.f32.mrf.mxu0
      %v286 = vadd.f32 %v249, %v285
      %287 = vdwg.mxu0
      %288 = vmatpush.msra.mxu0 0.0
      %289 = vmatpush.msra.mxu0 0.0
      %290 = vmatpush.msra.mxu0 0.0
      %291 = vmatpush.msra.mxu0 0.0
      %292 = vmatpush.msra.mxu0 0.0
      %293 = vmatpush.msra.mxu0 0.0
      %294 = vmatpush.msra.mxu0 0.0
      %295 = vmatpush.msra.mxu0 0.0
      %296 = vmatpush.msra.mxu0 0.0
      %297 = vmatpush.msra.mxu0 0.0
      %298 = vmatpush.msra.mxu0 0.0
      %299 = vmatpush.msra.mxu0 0.0
      %v300 = vand.u32 %v93, 4294901760
      %301 = vmatpush.msra.mxu0 %v300
      %v302 = vand.u32 %v92, 4294901760
      %303 = vmatpush.msra.mxu0 %v302
      %v304 = vand.u32 %v91, 4294901760
      %305 = vmatpush.msra.mxu0 %v304
      %v306 = vand.u32 %v90, 4294901760
      %307 = vmatpush.msra.mxu0 %v306
      %v308 = vand.u32 %v96, 4294901760
      %309 = vmatmul.f32.gmra.mxu0 %v308
      %v310 = vpop.f32.mrf.mxu0
      %v311 = vadd.f32 %v282, %v310
      %v312 = vand.u32 %v99, 4294901760
      %313 = vmatmul.f32.gmra.mxu0 %v312
      %v314 = vpop.f32.mrf.mxu0
      %v315 = vadd.f32 %v286, %v314
      %316 = vdwg.mxu0
      %v317 = vmul.f32 %v311, 0.25
      %v318 = vmul.f32 %v315, 0.25
      %319 = vst [vmem:[#allocation2] sm:$0xff] %v317
      %320 = vst [vmem:[#allocation2 + $0x8] sm:$0xff] %v318
    $region41: #{tpu_custom_call.1} parent=1 // pred_fallthru
      _
    %v321 = vld [vmem:[#allocation3] sm:$0xff]
    %v322 = vld [vmem:[#allocation3 + $0x8] sm:$0xff]
    %v323 = vld [vmem:[#allocation6] sm:$0xff]
    %v324 = vld [vmem:[#allocation6 + $0x8] sm:$0xff]
    %v325 = vld [vmem:[#allocation6 + $0x10] sm:$0xff]
    %v326 = vld [vmem:[#allocation6 + $0x18] sm:$0xff]
    %v327 = vld [vmem:[#allocation2] sm:$0xff]
    %v328 = vld [vmem:[#allocation2 + $0x8] sm:$0xff]
    %v329 = vld [vmem:[#allocation9] sm:$0xff]
    %v330 = vld [vmem:[#allocation9 + $0x8] sm:$0xff]
    %v331 = vld [vmem:[#allocation9 + $0x10] sm:$0xff]
    %v332 = vld [vmem:[#allocation9 + $0x18] sm:$0xff]
    %v333 = vld [vmem:[#allocation9 + $0x20] sm:$0xff]
    %v334 = vld [vmem:[#allocation9 + $0x28] sm:$0xff]
    %v335 = vld [vmem:[#allocation9 + $0x30] sm:$0xff]
    %v336 = vld [vmem:[#allocation9 + $0x38] sm:$0xff]
    %v337 = vld [vmem:[#allocation9 + $0x40] sm:$0xff]
    %v338 = vld [vmem:[#allocation9 + $0x48] sm:$0xff]
    %v339 = vld [vmem:[#allocation9 + $0x50] sm:$0xff]
    %v340 = vld [vmem:[#allocation9 + $0x58] sm:$0xff]
    %v341 = vld [vmem:[#allocation9 + $0x60] sm:$0xff]
    %v342 = vld [vmem:[#allocation9 + $0x68] sm:$0xff]
    %v343 = vld [vmem:[#allocation9 + $0x70] sm:$0xff]
    %v344 = vld [vmem:[#allocation9 + $0x78] sm:$0xff]
    %v345 = vand.u32 %v344, 4294901760
    %346 = vmatpush.msra.mxu0 %v345
    %v347 = vand.u32 %v343, 4294901760
    %348 = vmatpush.msra.mxu0 %v347
    %v349 = vand.u32 %v342, 4294901760
    %350 = vmatpush.msra.mxu0 %v349
    %v351 = vand.u32 %v341, 4294901760
    %352 = vmatpush.msra.mxu0 %v351
    %v353 = vand.u32 %v340, 4294901760
    %354 = vmatpush.msra.mxu0 %v353
    %v355 = vand.u32 %v339, 4294901760
    %356 = vmatpush.msra.mxu0 %v355
    %v357 = vand.u32 %v338, 4294901760
    %358 = vmatpush.msra.mxu0 %v357
    %v359 = vand.u32 %v337, 4294901760
    %360 = vmatpush.msra.mxu0 %v359
    %v361 = vand.u32 %v336, 4294901760
    %362 = vmatpush.msra.mxu0 %v361
    %v363 = vand.u32 %v335, 4294901760
    %364 = vmatpush.msra.mxu0 %v363
    %v365 = vand.u32 %v334, 4294901760
    %366 = vmatpush.msra.mxu0 %v365
    %v367 = vand.u32 %v333, 4294901760
    %368 = vmatpush.msra.mxu0 %v367
    %v369 = vand.u32 %v332, 4294901760
    %370 = vmatpush.msra.mxu0 %v369
    %v371 = vand.u32 %v331, 4294901760
    %372 = vmatpush.msra.mxu0 %v371
    %v373 = vand.u32 %v330, 4294901760
    %374 = vmatpush.msra.mxu0 %v373
    %v375 = vand.u32 %v329, 4294901760
    %376 = vmatpush.msra.mxu0 %v375
    %v377 = vand.u32 %v327, 4294901760
    %v378 = vsub.f32 %v327, %v377
    %v379 = vand.u32 %v378, 4294901760
    %v380 = vsub.f32 %v378, %v379
    %v381 = vand.u32 %v380, 4294901760
    %382 = vmatmul.f32.gmra.mxu0 %v381
    %v383 = vpop.f32.mrf.mxu0
    %v384 = vadd.f32 0.0, %v383
    %v385 = vand.u32 %v328, 4294901760
    %v386 = vsub.f32 %v328, %v385
    %v387 = vand.u32 %v386, 4294901760
    %v388 = vsub.f32 %v386, %v387
    %v389 = vand.u32 %v388, 4294901760
    %390 = vmatmul.f32.gmra.mxu0 %v389
    %v391 = vpop.f32.mrf.mxu0
    %v392 = vadd.f32 0.0, %v391
    %393 = vdwg.mxu0
    %v394 = vand.u32 %v344, 4294901760
    %v395 = vsub.f32 %v344, %v394
    %v396 = vand.u32 %v395, 4294901760
    %v397 = vsub.f32 %v395, %v396
    %v398 = vand.u32 %v397, 4294901760
    %399 = vmatpush.msra.mxu0 %v398
    %v400 = vand.u32 %v343, 4294901760
    %v401 = vsub.f32 %v343, %v400
    %v402 = vand.u32 %v401, 4294901760
    %v403 = vsub.f32 %v401, %v402
    %v404 = vand.u32 %v403, 4294901760
    %405 = vmatpush.msra.mxu0 %v404
    %v406 = vand.u32 %v342, 4294901760
    %v407 = vsub.f32 %v342, %v406
    %v408 = vand.u32 %v407, 4294901760
    %v409 = vsub.f32 %v407, %v408
    %v410 = vand.u32 %v409, 4294901760
    %411 = vmatpush.msra.mxu0 %v410
    %v412 = vand.u32 %v341, 4294901760
    %v413 = vsub.f32 %v341, %v412
    %v414 = vand.u32 %v413, 4294901760
    %v415 = vsub.f32 %v413, %v414
    %v416 = vand.u32 %v415, 4294901760
    %417 = vmatpush.msra.mxu0 %v416
    %v418 = vand.u32 %v340, 4294901760
    %v419 = vsub.f32 %v340, %v418
    %v420 = vand.u32 %v419, 4294901760
    %v421 = vsub.f32 %v419, %v420
    %v422 = vand.u32 %v421, 4294901760
    %423 = vmatpush.msra.mxu0 %v422
    %v424 = vand.u32 %v339, 4294901760
    %v425 = vsub.f32 %v339, %v424
    %v426 = vand.u32 %v425, 4294901760
    %v427 = vsub.f32 %v425, %v426
    %v428 = vand.u32 %v427, 4294901760
    %429 = vmatpush.msra.mxu0 %v428
    %v430 = vand.u32 %v338, 4294901760
    %v431 = vsub.f32 %v338, %v430
    %v432 = vand.u32 %v431, 4294901760
    %v433 = vsub.f32 %v431, %v432
    %v434 = vand.u32 %v433, 4294901760
    %435 = vmatpush.msra.mxu0 %v434
    %v436 = vand.u32 %v337, 4294901760
    %v437 = vsub.f32 %v337, %v436
    %v438 = vand.u32 %v437, 4294901760
    %v439 = vsub.f32 %v437, %v438
    %v440 = vand.u32 %v439, 4294901760
    %441 = vmatpush.msra.mxu0 %v440
    %v442 = vand.u32 %v336, 4294901760
    %v443 = vsub.f32 %v336, %v442
    %v444 = vand.u32 %v443, 4294901760
    %v445 = vsub.f32 %v443, %v444
    %v446 = vand.u32 %v445, 4294901760
    %447 = vmatpush.msra.mxu0 %v446
    %v448 = vand.u32 %v335, 4294901760
    %v449 = vsub.f32 %v335, %v448
    %v450 = vand.u32 %v449, 4294901760
    %v451 = vsub.f32 %v449, %v450
    %v452 = vand.u32 %v451, 4294901760
    %453 = vmatpush.msra.mxu0 %v452
    %v454 = vand.u32 %v334, 4294901760
    %v455 = vsub.f32 %v334, %v454
    %v456 = vand.u32 %v455, 4294901760
    %v457 = vsub.f32 %v455, %v456
    %v458 = vand.u32 %v457, 4294901760
    %459 = vmatpush.msra.mxu0 %v458
    %v460 = vand.u32 %v333, 4294901760
    %v461 = vsub.f32 %v333, %v460
    %v462 = vand.u32 %v461, 4294901760
    %v463 = vsub.f32 %v461, %v462
    %v464 = vand.u32 %v463, 4294901760
    %465 = vmatpush.msra.mxu0 %v464
    %v466 = vand.u32 %v332, 4294901760
    %v467 = vsub.f32 %v332, %v466
    %v468 = vand.u32 %v467, 4294901760
    %v469 = vsub.f32 %v467, %v468
    %v470 = vand.u32 %v469, 4294901760
    %471 = vmatpush.msra.mxu0 %v470
    %v472 = vand.u32 %v331, 4294901760
    %v473 = vsub.f32 %v331, %v472
    %v474 = vand.u32 %v473, 4294901760
    %v475 = vsub.f32 %v473, %v474
    %v476 = vand.u32 %v475, 4294901760
    %477 = vmatpush.msra.mxu0 %v476
    %v478 = vand.u32 %v330, 4294901760
    %v479 = vsub.f32 %v330, %v478
    %v480 = vand.u32 %v479, 4294901760
    %v481 = vsub.f32 %v479, %v480
    %v482 = vand.u32 %v481, 4294901760
    %483 = vmatpush.msra.mxu0 %v482
    %v484 = vand.u32 %v329, 4294901760
    %v485 = vsub.f32 %v329, %v484
    %v486 = vand.u32 %v485, 4294901760
    %v487 = vsub.f32 %v485, %v486
    %v488 = vand.u32 %v487, 4294901760
    %489 = vmatpush.msra.mxu0 %v488
    %v490 = vand.u32 %v327, 4294901760
    %491 = vmatmul.f32.gmra.mxu0 %v490
    %v492 = vpop.f32.mrf.mxu0
    %v493 = vadd.f32 %v384, %v492
    %v494 = vand.u32 %v328, 4294901760
    %495 = vmatmul.f32.gmra.mxu0 %v494
    %v496 = vpop.f32.mrf.mxu0
    %v497 = vadd.f32 %v392, %v496
    %498 = vdwg.mxu0
    %v499 = vand.u32 %v344, 4294901760
    %v500 = vsub.f32 %v344, %v499
    %501 = vmatpush.msra.mxu0 %v500
    %v502 = vand.u32 %v343, 4294901760
    %v503 = vsub.f32 %v343, %v502
    %504 = vmatpush.msra.mxu0 %v503
    %v505 = vand.u32 %v342, 4294901760
    %v506 = vsub.f32 %v342, %v505
    %507 = vmatpush.msra.mxu0 %v506
    %v508 = vand.u32 %v341, 4294901760
    %v509 = vsub.f32 %v341, %v508
    %510 = vmatpush.msra.mxu0 %v509
    %v511 = vand.u32 %v340, 4294901760
    %v512 = vsub.f32 %v340, %v511
    %513 = vmatpush.msra.mxu0 %v512
    %v514 = vand.u32 %v339, 4294901760
    %v515 = vsub.f32 %v339, %v514
    %516 = vmatpush.msra.mxu0 %v515
    %v517 = vand.u32 %v338, 4294901760
    %v518 = vsub.f32 %v338, %v517
    %519 = vmatpush.msra.mxu0 %v518
    %v520 = vand.u32 %v337, 4294901760
    %v521 = vsub.f32 %v337, %v520
    %522 = vmatpush.msra.mxu0 %v521
    %v523 = vand.u32 %v336, 4294901760
    %v524 = vsub.f32 %v336, %v523
    %525 = vmatpush.msra.mxu0 %v524
    %v526 = vand.u32 %v335, 4294901760
    %v527 = vsub.f32 %v335, %v526
    %528 = vmatpush.msra.mxu0 %v527
    %v529 = vand.u32 %v334, 4294901760
    %v530 = vsub.f32 %v334, %v529
    %531 = vmatpush.msra.mxu0 %v530
    %v532 = vand.u32 %v333, 4294901760
    %v533 = vsub.f32 %v333, %v532
    %534 = vmatpush.msra.mxu0 %v533
    %v535 = vand.u32 %v332, 4294901760
    %v536 = vsub.f32 %v332, %v535
    %537 = vmatpush.msra.mxu0 %v536
    %v538 = vand.u32 %v331, 4294901760
    %v539 = vsub.f32 %v331, %v538
    %540 = vmatpush.msra.mxu0 %v539
    %v541 = vand.u32 %v330, 4294901760
    %v542 = vsub.f32 %v330, %v541
    %543 = vmatpush.msra.mxu0 %v542
    %v544 = vand.u32 %v329, 4294901760
    %v545 = vsub.f32 %v329, %v544
    %546 = vmatpush.msra.mxu0 %v545
    %v547 = vand.u32 %v327, 4294901760
    %v548 = vsub.f32 %v327, %v547
    %549 = vmatmul.f32.gmra.mxu0 %v548
    %v550 = vpop.f32.mrf.mxu0
    %v551 = vadd.f32 %v493, %v550
    %v552 = vand.u32 %v328, 4294901760
    %v553 = vsub.f32 %v328, %v552
    %554 = vmatmul.f32.gmra.mxu0 %v553
    %v555 = vpop.f32.mrf.mxu0
    %v556 = vadd.f32 %v497, %v555
    %557 = vdwg.mxu0
    %v558 = vand.u32 %v344, 4294901760
    %559 = vmatpush.msra.mxu0 %v558
    %v560 = vand.u32 %v343, 4294901760
    %561 = vmatpush.msra.mxu0 %v560
    %v562 = vand.u32 %v342, 4294901760
    %563 = vmatpush.msra.mxu0 %v562
    %v564 = vand.u32 %v341, 4294901760
    %565 = vmatpush.msra.mxu0 %v564
    %v566 = vand.u32 %v340, 4294901760
    %567 = vmatpush.msra.mxu0 %v566
    %v568 = vand.u32 %v339, 4294901760
    %569 = vmatpush.msra.mxu0 %v568
    %v570 = vand.u32 %v338, 4294901760
    %571 = vmatpush.msra.mxu0 %v570
    %v572 = vand.u32 %v337, 4294901760
    %573 = vmatpush.msra.mxu0 %v572
    %v574 = vand.u32 %v336, 4294901760
    %575 = vmatpush.msra.mxu0 %v574
    %v576 = vand.u32 %v335, 4294901760
    %577 = vmatpush.msra.mxu0 %v576
    %v578 = vand.u32 %v334, 4294901760
    %579 = vmatpush.msra.mxu0 %v578
    %v580 = vand.u32 %v333, 4294901760
    %581 = vmatpush.msra.mxu0 %v580
    %v582 = vand.u32 %v332, 4294901760
    %583 = vmatpush.msra.mxu0 %v582
    %v584 = vand.u32 %v331, 4294901760
    %585 = vmatpush.msra.mxu0 %v584
    %v586 = vand.u32 %v330, 4294901760
    %587 = vmatpush.msra.mxu0 %v586
    %v588 = vand.u32 %v329, 4294901760
    %589 = vmatpush.msra.mxu0 %v588
    %v590 = vand.u32 %v327, 4294901760
    %v591 = vsub.f32 %v327, %v590
    %v592 = vand.u32 %v591, 4294901760
    %593 = vmatmul.f32.gmra.mxu0 %v592
    %v594 = vpop.f32.mrf.mxu0
    %v595 = vadd.f32 %v551, %v594
    %v596 = vand.u32 %v328, 4294901760
    %v597 = vsub.f32 %v328, %v596
    %v598 = vand.u32 %v597, 4294901760
    %599 = vmatmul.f32.gmra.mxu0 %v598
    %v600 = vpop.f32.mrf.mxu0
    %v601 = vadd.f32 %v556, %v600
    %602 = vdwg.mxu0
    %v603 = vand.u32 %v344, 4294901760
    %v604 = vsub.f32 %v344, %v603
    %v605 = vand.u32 %v604, 4294901760
    %606 = vmatpush.msra.mxu0 %v605
    %v607 = vand.u32 %v343, 4294901760
    %v608 = vsub.f32 %v343, %v607
    %v609 = vand.u32 %v608, 4294901760
    %610 = vmatpush.msra.mxu0 %v609
    %v611 = vand.u32 %v342, 4294901760
    %v612 = vsub.f32 %v342, %v611
    %v613 = vand.u32 %v612, 4294901760
    %614 = vmatpush.msra.mxu0 %v613
    %v615 = vand.u32 %v341, 4294901760
    %v616 = vsub.f32 %v341, %v615
    %v617 = vand.u32 %v616, 4294901760
    %618 = vmatpush.msra.mxu0 %v617
    %v619 = vand.u32 %v340, 4294901760
    %v620 = vsub.f32 %v340, %v619
    %v621 = vand.u32 %v620, 4294901760
    %622 = vmatpush.msra.mxu0 %v621
    %v623 = vand.u32 %v339, 4294901760
    %v624 = vsub.f32 %v339, %v623
    %v625 = vand.u32 %v624, 4294901760
    %626 = vmatpush.msra.mxu0 %v625
    %v627 = vand.u32 %v338, 4294901760
    %v628 = vsub.f32 %v338, %v627
    %v629 = vand.u32 %v628, 4294901760
    %630 = vmatpush.msra.mxu0 %v629
    %v631 = vand.u32 %v337, 4294901760
    %v632 = vsub.f32 %v337, %v631
    %v633 = vand.u32 %v632, 4294901760
    %634 = vmatpush.msra.mxu0 %v633
    %v635 = vand.u32 %v336, 4294901760
    %v636 = vsub.f32 %v336, %v635
    %v637 = vand.u32 %v636, 4294901760
    %638 = vmatpush.msra.mxu0 %v637
    %v639 = vand.u32 %v335, 4294901760
    %v640 = vsub.f32 %v335, %v639
    %v641 = vand.u32 %v640, 4294901760
    %642 = vmatpush.msra.mxu0 %v641
    %v643 = vand.u32 %v334, 4294901760
    %v644 = vsub.f32 %v334, %v643
    %v645 = vand.u32 %v644, 4294901760
    %646 = vmatpush.msra.mxu0 %v645
    %v647 = vand.u32 %v333, 4294901760
    %v648 = vsub.f32 %v333, %v647
    %v649 = vand.u32 %v648, 4294901760
    %650 = vmatpush.msra.mxu0 %v649
    %v651 = vand.u32 %v332, 4294901760
    %v652 = vsub.f32 %v332, %v651
    %v653 = vand.u32 %v652, 4294901760
    %654 = vmatpush.msra.mxu0 %v653
    %v655 = vand.u32 %v331, 4294901760
    %v656 = vsub.f32 %v331, %v655
    %v657 = vand.u32 %v656, 4294901760
    %658 = vmatpush.msra.mxu0 %v657
    %v659 = vand.u32 %v330, 4294901760
    %v660 = vsub.f32 %v330, %v659
    %v661 = vand.u32 %v660, 4294901760
    %662 = vmatpush.msra.mxu0 %v661
    %v663 = vand.u32 %v329, 4294901760
    %v664 = vsub.f32 %v329, %v663
    %v665 = vand.u32 %v664, 4294901760
    %666 = vmatpush.msra.mxu0 %v665
    %v667 = vand.u32 %v327, 4294901760
    %668 = vmatmul.f32.gmra.mxu0 %v667
    %v669 = vpop.f32.mrf.mxu0
    %v670 = vadd.f32 %v595, %v669
    %v671 = vand.u32 %v328, 4294901760
    %672 = vmatmul.f32.gmra.mxu0 %v671
    %v673 = vpop.f32.mrf.mxu0
    %v674 = vadd.f32 %v601, %v673
    %675 = vdwg.mxu0
    %v676 = vand.u32 %v344, 4294901760
    %677 = vmatpush.msra.mxu0 %v676
    %v678 = vand.u32 %v343, 4294901760
    %679 = vmatpush.msra.mxu0 %v678
    %v680 = vand.u32 %v342, 4294901760
    %681 = vmatpush.msra.mxu0 %v680
    %v682 = vand.u32 %v341, 4294901760
    %683 = vmatpush.msra.mxu0 %v682
    %v684 = vand.u32 %v340, 4294901760
    %685 = vmatpush.msra.mxu0 %v684
    %v686 = vand.u32 %v339, 4294901760
    %687 = vmatpush.msra.mxu0 %v686
    %v688 = vand.u32 %v338, 4294901760
    %689 = vmatpush.msra.mxu0 %v688
    %v690 = vand.u32 %v337, 4294901760
    %691 = vmatpush.msra.mxu0 %v690
    %v692 = vand.u32 %v336, 4294901760
    %693 = vmatpush.msra.mxu0 %v692
    %v694 = vand.u32 %v335, 4294901760
    %695 = vmatpush.msra.mxu0 %v694
    %v696 = vand.u32 %v334, 4294901760
    %697 = vmatpush.msra.mxu0 %v696
    %v698 = vand.u32 %v333, 4294901760
    %699 = vmatpush.msra.mxu0 %v698
    %v700 = vand.u32 %v332, 4294901760
    %701 = vmatpush.msra.mxu0 %v700
    %v702 = vand.u32 %v331, 4294901760
    %703 = vmatpush.msra.mxu0 %v702
    %v704 = vand.u32 %v330, 4294901760
    %705 = vmatpush.msra.mxu0 %v704
    %v706 = vand.u32 %v329, 4294901760
    %707 = vmatpush.msra.mxu0 %v706
    %v708 = vand.u32 %v327, 4294901760
    %709 = vmatmul.f32.gmra.mxu0 %v708
    %v710 = vpop.f32.mrf.mxu0
    %v711 = vadd.f32 %v670, %v710
    %v712 = vand.u32 %v328, 4294901760
    %713 = vmatmul.f32.gmra.mxu0 %v712
    %v714 = vpop.f32.mrf.mxu0
    %v715 = vadd.f32 %v674, %v714
    %716 = vdwg.mxu0
    %vm717 = vcmask 261120
    %v719 = vsel %vm717, %v321, 0
    %v722 = vsel %vm717, %v322, 0
    %724 = vmatpush.msra.mxu0 0.0
    %725 = vmatpush.msra.mxu0 0.0
    %726 = vmatpush.msra.mxu0 0.0
    %727 = vmatpush.msra.mxu0 0.0
    %728 = vmatpush.msra.mxu0 0.0
    %729 = vmatpush.msra.mxu0 0.0
    %730 = vmatpush.msra.mxu0 0.0
    %731 = vmatpush.msra.mxu0 0.0
    %732 = vmatpush.msra.mxu0 0.0
    %733 = vmatpush.msra.mxu0 0.0
    %734 = vmatpush.msra.mxu0 0.0
    %735 = vmatpush.msra.mxu0 0.0
    %v736 = vand.u32 %v326, 4294901760
    %737 = vmatpush.msra.mxu0 %v736
    %v738 = vand.u32 %v325, 4294901760
    %739 = vmatpush.msra.mxu0 %v738
    %v740 = vand.u32 %v324, 4294901760
    %741 = vmatpush.msra.mxu0 %v740
    %v742 = vand.u32 %v323, 4294901760
    %743 = vmatpush.msra.mxu0 %v742
    %v744 = vand.u32 %v719, 4294901760
    %v745 = vsub.f32 %v719, %v744
    %v746 = vand.u32 %v745, 4294901760
    %v747 = vsub.f32 %v745, %v746
    %v748 = vand.u32 %v747, 4294901760
    %749 = vmatmul.f32.gmra.mxu0 %v748
    %v750 = vpop.f32.mrf.mxu0
    %v751 = vadd.f32 %v711, %v750
    %v752 = vand.u32 %v722, 4294901760
    %v753 = vsub.f32 %v722, %v752
    %v754 = vand.u32 %v753, 4294901760
    %v755 = vsub.f32 %v753, %v754
    %v756 = vand.u32 %v755, 4294901760
    %757 = vmatmul.f32.gmra.mxu0 %v756
    %v758 = vpop.f32.mrf.mxu0
    %v759 = vadd.f32 %v715, %v758
    %760 = vdwg.mxu0
    %761 = vmatpush.msra.mxu0 0.0
    %762 = vmatpush.msra.mxu0 0.0
    %763 = vmatpush.msra.mxu0 0.0
    %764 = vmatpush.msra.mxu0 0.0
    %765 = vmatpush.msra.mxu0 0.0
    %766 = vmatpush.msra.mxu0 0.0
    %767 = vmatpush.msra.mxu0 0.0
    %768 = vmatpush.msra.mxu0 0.0
    %769 = vmatpush.msra.mxu0 0.0
    %770 = vmatpush.msra.mxu0 0.0
    %771 = vmatpush.msra.mxu0 0.0
    %772 = vmatpush.msra.mxu0 0.0
    %v773 = vand.u32 %v326, 4294901760
    %v774 = vsub.f32 %v326, %v773
    %v775 = vand.u32 %v774, 4294901760
    %v776 = vsub.f32 %v774, %v775
    %v777 = vand.u32 %v776, 4294901760
    %778 = vmatpush.msra.mxu0 %v777
    %v779 = vand.u32 %v325, 4294901760
    %v780 = vsub.f32 %v325, %v779
    %v781 = vand.u32 %v780, 4294901760
    %v782 = vsub.f32 %v780, %v781
    %v783 = vand.u32 %v782, 4294901760
    %784 = vmatpush.msra.mxu0 %v783
    %v785 = vand.u32 %v324, 4294901760
    %v786 = vsub.f32 %v324, %v785
    %v787 = vand.u32 %v786, 4294901760
    %v788 = vsub.f32 %v786, %v787
    %v789 = vand.u32 %v788, 4294901760
    %790 = vmatpush.msra.mxu0 %v789
    %v791 = vand.u32 %v323, 4294901760
    %v792 = vsub.f32 %v323, %v791
    %v793 = vand.u32 %v792, 4294901760
    %v794 = vsub.f32 %v792, %v793
    %v795 = vand.u32 %v794, 4294901760
    %796 = vmatpush.msra.mxu0 %v795
    %v797 = vand.u32 %v719, 4294901760
    %798 = vmatmul.f32.gmra.mxu0 %v797
    %v799 = vpop.f32.mrf.mxu0
    %v800 = vadd.f32 %v751, %v799
    %v801 = vand.u32 %v722, 4294901760
    %802 = vmatmul.f32.gmra.mxu0 %v801
    %v803 = vpop.f32.mrf.mxu0
    %v804 = vadd.f32 %v759, %v803
    %805 = vdwg.mxu0
    %806 = vmatpush.msra.mxu0 0.0
    %807 = vmatpush.msra.mxu0 0.0
    %808 = vmatpush.msra.mxu0 0.0
    %809 = vmatpush.msra.mxu0 0.0
    %810 = vmatpush.msra.mxu0 0.0
    %811 = vmatpush.msra.mxu0 0.0
    %812 = vmatpush.msra.mxu0 0.0
    %813 = vmatpush.msra.mxu0 0.0
    %814 = vmatpush.msra.mxu0 0.0
    %815 = vmatpush.msra.mxu0 0.0
    %816 = vmatpush.msra.mxu0 0.0
    %817 = vmatpush.msra.mxu0 0.0
    %v818 = vand.u32 %v326, 4294901760
    %v819 = vsub.f32 %v326, %v818
    %820 = vmatpush.msra.mxu0 %v819
    %v821 = vand.u32 %v325, 4294901760
    %v822 = vsub.f32 %v325, %v821
    %823 = vmatpush.msra.mxu0 %v822
    %v824 = vand.u32 %v324, 4294901760
    %v825 = vsub.f32 %v324, %v824
    %826 = vmatpush.msra.mxu0 %v825
    %v827 = vand.u32 %v323, 4294901760
    %v828 = vsub.f32 %v323, %v827
    %829 = vmatpush.msra.mxu0 %v828
    %v830 = vand.u32 %v719, 4294901760
    %v831 = vsub.f32 %v719, %v830
    %832 = vmatmul.f32.gmra.mxu0 %v831
    %v833 = vpop.f32.mrf.mxu0
    %v834 = vadd.f32 %v800, %v833
    %v835 = vand.u32 %v722, 4294901760
    %v836 = vsub.f32 %v722, %v835
    %837 = vmatmul.f32.gmra.mxu0 %v836
    %v838 = vpop.f32.mrf.mxu0
    %v839 = vadd.f32 %v804, %v838
    %840 = vdwg.mxu0
    %841 = vmatpush.msra.mxu0 0.0
    %842 = vmatpush.msra.mxu0 0.0
    %843 = vmatpush.msra.mxu0 0.0
    %844 = vmatpush.msra.mxu0 0.0
    %845 = vmatpush.msra.mxu0 0.0
    %846 = vmatpush.msra.mxu0 0.0
    %847 = vmatpush.msra.mxu0 0.0
    %848 = vmatpush.msra.mxu0 0.0
    %849 = vmatpush.msra.mxu0 0.0
    %850 = vmatpush.msra.mxu0 0.0
    %851 = vmatpush.msra.mxu0 0.0
    %852 = vmatpush.msra.mxu0 0.0
    %v853 = vand.u32 %v326, 4294901760
    %854 = vmatpush.msra.mxu0 %v853
    %v855 = vand.u32 %v325, 4294901760
    %856 = vmatpush.msra.mxu0 %v855
    %v857 = vand.u32 %v324, 4294901760
    %858 = vmatpush.msra.mxu0 %v857
    %v859 = vand.u32 %v323, 4294901760
    %860 = vmatpush.msra.mxu0 %v859
    %v861 = vand.u32 %v719, 4294901760
    %v862 = vsub.f32 %v719, %v861
    %v863 = vand.u32 %v862, 4294901760
    %864 = vmatmul.f32.gmra.mxu0 %v863
    %v865 = vpop.f32.mrf.mxu0
    %v866 = vadd.f32 %v834, %v865
    %v867 = vand.u32 %v722, 4294901760
    %v868 = vsub.f32 %v722, %v867
    %v869 = vand.u32 %v868, 4294901760
    %870 = vmatmul.f32.gmra.mxu0 %v869
    %v871 = vpop.f32.mrf.mxu0
    %v872 = vadd.f32 %v839, %v871
    %873 = vdwg.mxu0
    %874 = vmatpush.msra.mxu0 0.0
    %875 = vmatpush.msra.mxu0 0.0
    %876 = vmatpush.msra.mxu0 0.0
    %877 = vmatpush.msra.mxu0 0.0
    %878 = vmatpush.msra.mxu0 0.0
    %879 = vmatpush.msra.mxu0 0.0
    %880 = vmatpush.msra.mxu0 0.0
    %881 = vmatpush.msra.mxu0 0.0
    %882 = vmatpush.msra.mxu0 0.0
    %883 = vmatpush.msra.mxu0 0.0
    %884 = vmatpush.msra.mxu0 0.0
    %885 = vmatpush.msra.mxu0 0.0
    %v886 = vand.u32 %v326, 4294901760
    %v887 = vsub.f32 %v326, %v886
    %v888 = vand.u32 %v887, 4294901760
    %889 = vmatpush.msra.mxu0 %v888
    %v890 = vand.u32 %v325, 4294901760
    %v891 = vsub.f32 %v325, %v890
    %v892 = vand.u32 %v891, 4294901760
    %893 = vmatpush.msra.mxu0 %v892
    %v894 = vand.u32 %v324, 4294901760
    %v895 = vsub.f32 %v324, %v894
    %v896 = vand.u32 %v895, 4294901760
    %897 = vmatpush.msra.mxu0 %v896
    %v898 = vand.u32 %v323, 4294901760
    %v899 = vsub.f32 %v323, %v898
    %v900 = vand.u32 %v899, 4294901760
    %901 = vmatpush.msra.mxu0 %v900
    %v902 = vand.u32 %v719, 4294901760
    %903 = vmatmul.f32.gmra.mxu0 %v902
    %v904 = vpop.f32.mrf.mxu0
    %v905 = vadd.f32 %v866, %v904
    %v906 = vand.u32 %v722, 4294901760
    %907 = vmatmul.f32.gmra.mxu0 %v906
    %v908 = vpop.f32.mrf.mxu0
    %v909 = vadd.f32 %v872, %v908
    %910 = vdwg.mxu0
    %911 = vmatpush.msra.mxu0 0.0
    %912 = vmatpush.msra.mxu0 0.0
    %913 = vmatpush.msra.mxu0 0.0
    %914 = vmatpush.msra.mxu0 0.0
    %915 = vmatpush.msra.mxu0 0.0
    %916 = vmatpush.msra.mxu0 0.0
    %917 = vmatpush.msra.mxu0 0.0
    %918 = vmatpush.msra.mxu0 0.0
    %919 = vmatpush.msra.mxu0 0.0
    %920 = vmatpush.msra.mxu0 0.0
    %921 = vmatpush.msra.mxu0 0.0
    %922 = vmatpush.msra.mxu0 0.0
    %v923 = vand.u32 %v326, 4294901760
    %924 = vmatpush.msra.mxu0 %v923
    %v925 = vand.u32 %v325, 4294901760
    %926 = vmatpush.msra.mxu0 %v925
    %v927 = vand.u32 %v324, 4294901760
    %928 = vmatpush.msra.mxu0 %v927
    %v929 = vand.u32 %v323, 4294901760
    %930 = vmatpush.msra.mxu0 %v929
    %v931 = vand.u32 %v719, 4294901760
    %932 = vmatmul.f32.gmra.mxu0 %v931
    %v933 = vpop.f32.mrf.mxu0
    %v934 = vadd.f32 %v905, %v933
    %v935 = vand.u32 %v722, 4294901760
    %936 = vmatmul.f32.gmra.mxu0 %v935
    %v937 = vpop.f32.mrf.mxu0
    %v938 = vadd.f32 %v909, %v937
    %939 = vdwg.mxu0
    %v940 = vld [vmem:[%s2] sm:$0x1]
    %v942 = vperm.slane %v940, 0
    %v944 = vadd.f32 %v934, %v942
    %v945 = vadd.f32 %v938, %v942
    %946 = vst [vmem:[#allocation11] sm:$0xff] %v944
    %947 = vst [vmem:[#allocation11 + $0x8] sm:$0xff] %v945
    // Predicated region
    $region42: #{tpu_custom_call.1} parent=1 // pred_check
      _
    $region43: #{tpu_custom_call.1} parent=1 // pred_check_branch
      %949 = sbr.rel (0) target = $region45
    $region44: #{tpu_custom_call.1} parent=1 // pred_region
      %951 = vsyncadd [#allocation5], 0
      %s952 = sshll.u32 [#allocation11], 4
      %s953 = int_to_ptr.vmem [resolvable:$true] %s952
      %s954 = sshll.u32 %s5, 4
      %s955 = int_to_ptr.hbm [resolvable:$true] %s954
      %960 = dma.vmem_to_hbm [thread:$0]  %s953, 256, %s955, [#allocation5], 128, 128, 8
    $region45: #{tpu_custom_call.1} parent=1 // pred_fallthru
      _
    // Predicated region
    $region46: #{tpu_custom_call.1} parent=1 // pred_check
      _
    $region47: #{tpu_custom_call.1} parent=1 // pred_check_branch
      %962 = sbr.rel (0) target = $region49
    $region48: #{tpu_custom_call.1} parent=1 // pred_region
      %964 = dma.done [#allocation5], 256
    $region49: #{tpu_custom_call.1} parent=1 // pred_fallthru
      _
    %965 = vsyncpa [#allocation4], 1
    %966 = vsyncpa [#allocation7], 1
    %967 = vsyncpa [#allocation10], 1
    %968 = vsyncpa [#allocation5], 1

</llo_original>
